<compile_context>
chip_gen: v7x
topology: tpu7x:2x2x1
jax: 0.10.0
libtpu: 0.0.40
codegen_flags: <defaults>
</compile_context>

<pallas_src>
import numpy as np
import jax
import jax.numpy as jnp
from jax.experimental import pallas as pl
from jax.experimental.pallas import tpu as pltpu

C = 16        # channels (Cin == Cout for every conv)
H = 16        # spatial height
W = 16        # spatial width
K = 7         # 7x7 convs
PAD = 3       # "same" padding for the 7x7 convs
WC = W * C    # 256 -> lane dimension (2 * 128, always unmasked vst)


def model_kernel(x1_ref, x2_ref, x3_ref, bmat_ref, bias_ref, m4_ref,
                 out_ref, act_ref):
    """One grid step == one of the three 7x7 convs (+ its epilogue).

    grid=(3,): conv i uses Toeplitz slab bmat[i] (bf16, 0.875 MiB); the slab
    for conv i+1 is double-buffered by the BlockSpec pipeline while conv i
    computes.  The running activation is carried across steps in act_ref.
    """
    i = pl.program_id(0)

    @pl.when(i == 0)
    def _():
        act_ref[...] = x1_ref[...]                 # conv1 input is x1

    # --- fused 7x7 conv in lane-dense (H, W*C) layout -----------------------
    # One bf16 matmul does the W-direction Toeplitz contraction for all 7 kh
    # taps at once; the H direction is a sublane roll (XLU) + row mask (VPU).
    x = act_ref[...].astype(jnp.bfloat16)
    xb = jnp.dot(x, bmat_ref[0],
                 preferred_element_type=jnp.float32)          # (H, K*WC) f32

    row = jax.lax.broadcasted_iota(jnp.int32, (H, WC), 0)
    acc = jnp.zeros((H, WC), jnp.float32)
    for kh in range(K):
        part = xb[:, kh * WC:(kh + 1) * WC]       # lane-aligned (H, WC) slice
        s = kh - PAD                               # out[h] += part[h + s]
        if s == 0:
            contrib = part
        else:
            rolled = pltpu.roll(part, shift=(-s) % H, axis=0)  # rolled[h]=part[h+s]
            lo, hi = max(0, -s), min(H, H - s)     # valid output rows (H zero-pad)
            contrib = jnp.where((row >= lo) & (row < hi), rolled, 0.0)
        acc = acc + contrib

    # --- per-conv epilogue (f32) --------------------------------------------
    @pl.when(i == 0)
    def _():
        act_ref[...] = acc + bias_ref[0:1, :] + x1_ref[...]        # v2

    @pl.when(i == 1)
    def _():
        act_ref[...] = acc + bias_ref[1:2, :] + x2_ref[...]        # v4

    @pl.when(i == 2)
    def _():
        v6 = jnp.maximum(acc + bias_ref[2:3, :], 0.0)              # relu(conv3)
        # 1x1 conv == block-diagonal (WC, WC) matmul in this layout
        v7 = jnp.dot(v6.astype(jnp.bfloat16), m4_ref[...],
                     preferred_element_type=jnp.float32) + bias_ref[3:4, :]
        out_ref[...] = jnp.maximum(x1_ref[...] + v7 + x3_ref[...], 0.0)


def pack_params(params):
    """One-time wrapper-side expansion of conv weights (hoisted off hot path)."""
    w1, b1, w2, b2, w3, b3, w4, b4 = params

    # Toeplitz-in-W band: band[w_in, w_out, kw] = 1 iff w_in == w_out + kw - PAD
    w_in = np.arange(W)[:, None, None]
    w_out = np.arange(W)[None, :, None]
    kw = np.arange(K)[None, None, :]
    band = jnp.asarray((w_in == w_out + kw - PAD).astype(np.float32))  # (W,W,K)

    def toeplitz(w):   # OIHW (Cout, Cin, KH, KW) -> (W*Cin, KH*W*Cout)
        t = jnp.einsum('xyk,oihk->xihyo', band, w)     # (W, Cin, KH, W, Cout)
        return t.reshape(W * C, K * W * C)

    bmat = jnp.stack([toeplitz(w1), toeplitz(w2), toeplitz(w3)])   # (3,256,1792)

    # 1x1 conv as block-diagonal (WC, WC)
    m4 = jnp.einsum('xy,oi->xiyo', jnp.eye(W, dtype=jnp.float32),
                    w4[:, :, 0, 0]).reshape(WC, WC)

    # biases tiled over w so they broadcast along the (w, c) lane axis
    bias = jnp.stack([jnp.tile(b, W) for b in (b1, b2, b3, b4)])   # (4, 256)

    # bf16 weights (f32 accumulation happens on the MXU); biases stay f32.
    return bmat.astype(jnp.bfloat16), m4.astype(jnp.bfloat16), bias


def _model_forward(x1_nchw, x2_nchw, x3_nchw1, bmat, m4, bias):
    """Glue: layout transforms + pallas_call.  Inputs are NCHW like PyTorch."""
    def to_lane_dense(x):   # (1, C, H, W) -> (H, W*C), lane index = w*C + c
        return jnp.transpose(x[0], (1, 2, 0)).reshape(H, WC)

    x1 = to_lane_dense(x1_nchw)
    x2 = to_lane_dense(x2_nchw)
    # x3 is (1, C, H, 1); broadcasting adds x3[0, c, h, 0] over every w.
    x3_hc = jnp.transpose(x3_nchw1[0, :, :, 0], (1, 0))            # (H, C)
    x3 = jnp.tile(x3_hc[:, None, :], (1, W, 1)).reshape(H, WC)     # (H, W*C)

    def full(shape):   # whole-array block, constant index map (fetched once)
        return pl.BlockSpec(shape, lambda i: (0,) * len(shape))

    grid_spec = pltpu.PrefetchScalarGridSpec(
        num_scalar_prefetch=0,
        grid=(3,),                                 # one step per 7x7 conv
        in_specs=[
            full((H, WC)),                                       # x1
            full((H, WC)),                                       # x2
            full((H, WC)),                                       # x3 (pre-broadcast)
            pl.BlockSpec((1, WC, K * WC), lambda i: (i, 0, 0)),  # Toeplitz slab i
            full((4, WC)),                                       # biases
            full((WC, WC)),                                      # 1x1 conv matrix
        ],
        out_specs=full((H, WC)),
        scratch_shapes=[pltpu.VMEM((H, WC), jnp.float32)],       # activation carry
    )

    out = pl.pallas_call(
        model_kernel,
        out_shape=jax.ShapeDtypeStruct((H, WC), jnp.float32),
        grid_spec=grid_spec,
        compiler_params=pltpu.CompilerParams(
            dimension_semantics=("arbitrary",),       # convs are a serial chain
            vmem_limit_bytes=8 * 1024 * 1024),
    )(x1, x2, x3, bmat, bias, m4)

    # (H, W*C) -> (1, C, H, W)
    return jnp.transpose(out.reshape(H, W, C), (2, 0, 1))[None]


model_forward = jax.jit(_model_forward)


def reference_forward(x1, x2, x3, params, *, use_bf16):
    """Pure-JAX reference.

    use_bf16=False: PyTorch f32 semantics (HIGHEST precision).
    use_bf16=True : exactly mirrors the kernel's numerics (bf16 weights and
                    conv inputs, f32 accumulation) for a tight structural check.
    """
    w1, b1, w2, b2, w3, b3, w4, b4 = params
    cast = (lambda a: a.astype(jnp.bfloat16)) if use_bf16 else (lambda a: a)
    precision = None if use_bf16 else jax.lax.Precision.HIGHEST

    def conv(x, w, b, pad):
        y = jax.lax.conv_general_dilated(
            cast(x), cast(w), window_strides=(1, 1),
            padding=[(pad, pad), (pad, pad)],
            dimension_numbers=("NCHW", "OIHW", "NCHW"),
            preferred_element_type=jnp.float32,
            precision=precision)
        return y + b[None, :, None, None]

    v2 = conv(x1, w1, b1, PAD) + x1
    v4 = conv(v2, w2, b2, PAD) + x2
    v6 = jnp.maximum(conv(v4, w3, b3, PAD), 0.0)
    v7 = conv(v6, w4, b4, 0)
    return jnp.maximum(x1 + v7 + x3, 0.0)


def init_params(key):
    """Deterministic torch-default-style init (uniform +- 1/sqrt(fan_in))."""
    ks = jax.random.split(key, 8)

    def u(k, shape, fan_in):
        bound = 1.0 / np.sqrt(fan_in)
        return jax.random.uniform(k, shape, jnp.float32, -bound, bound)

    w1 = u(ks[0], (C, C, K, K), C * K * K); b1 = u(ks[1], (C,), C * K * K)
    w2 = u(ks[2], (C, C, K, K), C * K * K); b2 = u(ks[3], (C,), C * K * K)
    w3 = u(ks[4], (C, C, K, K), C * K * K); b3 = u(ks[5], (C,), C * K * K)
    w4 = u(ks[6], (C, C, 1, 1), C);         b4 = u(ks[7], (C,), C)
    return (w1, b1, w2, b2, w3, b3, w4, b4)


if __name__ == "__main__":
    key = jax.random.PRNGKey(0)
    k_in, k_par = jax.random.split(key)
    kx1, kx2, kx3 = jax.random.split(k_in, 3)

    x1 = jax.random.normal(kx1, (1, C, H, W), jnp.float32)
    x2 = jax.random.normal(kx2, (1, C, H, W), jnp.float32)
    x3 = jax.random.normal(kx3, (1, C, H, 1), jnp.float32)
    params = init_params(k_par)

    # Weight packing done ONCE, outside the jitted hot path.
    bmat, m4, bias = pack_params(params)

    out = jax.block_until_ready(model_forward(x1, x2, x3, bmat, m4, bias))

    # Tight structural check: same bf16-weight / f32-accumulate math in pure JAX.
    ref_bf16 = jax.block_until_ready(
        reference_forward(x1, x2, x3, params, use_bf16=True))
    np.testing.assert_allclose(np.asarray(out), np.asarray(ref_bf16),
                               rtol=2e-3, atol=2e-3)

    # End-to-end check vs full-f32 PyTorch semantics; bf16 MXU inputs through
    # three chained 7x7 convs give small bounded error (well under 3e-2).
    ref_f32 = jax.block_until_ready(
        reference_forward(x1, x2, x3, params, use_bf16=False))
    np.testing.assert_allclose(np.asarray(out), np.asarray(ref_f32),
                               rtol=3e-2, atol=3e-2)

    print("KERNEL_OK")
</pallas_src>

<mosaic_0001>
module attributes {stable_mosaic.version = 11 : i64} {
  func.func @model_kernel(%arg0: i32, %arg1: memref<16x256xf32, #tpu.memory_space<vmem>>, %arg2: memref<16x256xf32, #tpu.memory_space<vmem>>, %arg3: memref<16x256xf32, #tpu.memory_space<vmem>>, %arg4: memref<1x256x1792xbf16, #tpu.memory_space<vmem>>, %arg5: memref<4x256xf32, #tpu.memory_space<vmem>>, %arg6: memref<256x256xbf16, #tpu.memory_space<vmem>>, %arg7: memref<16x256xf32, #tpu.memory_space<vmem>>, %arg8: memref<16x256xf32, #tpu.memory_space<vmem>>) attributes {dimension_semantics = [#tpu.dimension_semantics<arbitrary>], iteration_bounds = array<i64: 3>, scalar_prefetch = 0 : i64, scratch_operands = 1 : i64, tpu.core_type = #tpu.core_type<tc>, window_params = [{pipeline_mode = #tpu.pipeline_mode<synchronous>, transform_indices = @transform_0, window_bounds = array<i64: 16, 256>}, {pipeline_mode = #tpu.pipeline_mode<synchronous>, transform_indices = @transform_1, window_bounds = array<i64: 16, 256>}, {pipeline_mode = #tpu.pipeline_mode<synchronous>, transform_indices = @transform_2, window_bounds = array<i64: 16, 256>}, {transform_indices = @transform_3, window_bounds = array<i64: 1, 256, 1792>}, {pipeline_mode = #tpu.pipeline_mode<synchronous>, transform_indices = @transform_4, window_bounds = array<i64: 4, 256>}, {pipeline_mode = #tpu.pipeline_mode<synchronous>, transform_indices = @transform_5, window_bounds = array<i64: 256, 256>}, {pipeline_mode = #tpu.pipeline_mode<synchronous>, transform_indices = @transform_6, window_bounds = array<i64: 16, 256>}]} {
    %c0_i32 = arith.constant 0 : i32
    %0 = arith.cmpi eq, %arg0, %c0_i32 : i32
    %1 = arith.extui %0 : i1 to i32
    %c0_i32_0 = arith.constant 0 : i32
    %2 = arith.cmpi ne, %1, %c0_i32_0 : i32
    scf.if %2 {
      %c0_29 = arith.constant 0 : index
      %c0_30 = arith.constant 0 : index
      %81 = vector.load %arg1[%c0_29, %c0_30] : memref<16x256xf32, #tpu.memory_space<vmem>>, vector<16x256xf32>
      %c0_31 = arith.constant 0 : index
      %c0_32 = arith.constant 0 : index
      %82 = vector.load %arg8[%c0_31, %c0_32] : memref<16x256xf32, #tpu.memory_space<vmem>>, vector<16x256xf32>
      tpu.vector_store %arg8[%c0_31, %c0_32], %81 {strides = array<i32>} : memref<16x256xf32, #tpu.memory_space<vmem>>, vector<16x256xf32>,
    } else {
    }
    %c0 = arith.constant 0 : index
    %c0_1 = arith.constant 0 : index
    %3 = vector.load %arg8[%c0, %c0_1] : memref<16x256xf32, #tpu.memory_space<vmem>>, vector<16x256xf32>
    %4 = arith.truncf %3 : vector<16x256xf32> to vector<16x256xbf16>
    %c0_2 = arith.constant 0 : index
    %c0_3 = arith.constant 0 : index
    %c0_4 = arith.constant 0 : index
    %5 = vector.load %arg4[%c0_2, %c0_3, %c0_4] : memref<1x256x1792xbf16, #tpu.memory_space<vmem>>, vector<1x256x1792xbf16>
    %6 = vector.shape_cast %5 : vector<1x256x1792xbf16> to vector<256x1792xbf16>
    %cst = arith.constant dense<0.000000e+00> : vector<16x1792xf32>
    %7 = tpu.matmul %4, %6, %cst {dimension_numbers = #tpu.dot_dimension_numbers<[1], [0], [0], [1], [0, 0, 1, 1], [], []>} : vector<16x256xbf16>, vector<256x1792xbf16>, vector<16x1792xf32> -> vector<16x1792xf32>
    %8 = tpu.iota {dimensions = array<i32: 0>} : vector<16x256xi32>
    %cst_5 = arith.constant 0.000000e+00 : f32
    %9 = vector.broadcast %cst_5 : f32 to vector<16x256xf32>
    %10 = vector.extract_strided_slice %7 {offsets = [0, 0], sizes = [16, 256], strides = [1, 1]} : vector<16x1792xf32> to vector<16x256xf32>
    %c3_i32 = arith.constant 3 : i32
    %11 = tpu.dynamic_rotate %10 by %c3_i32 dim 0 : vector<16x256xf32>, i32 -> vector<16x256xf32>
    %c3_i32_6 = arith.constant 3 : i32
    %12 = vector.broadcast %c3_i32_6 : i32 to vector<16x256xi32>
    %13 = arith.cmpi sge, %8, %12 : vector<16x256xi32>
    %c16_i32 = arith.constant 16 : i32
    %14 = vector.broadcast %c16_i32 : i32 to vector<16x256xi32>
    %15 = arith.cmpi slt, %8, %14 : vector<16x256xi32>
    %16 = arith.andi %13, %15 : vector<16x256xi1>
    %cst_7 = arith.constant 0.000000e+00 : f32
    %17 = vector.broadcast %cst_7 : f32 to vector<16x256xf32>
    %18 = arith.select %16, %11, %17 : vector<16x256xi1>, vector<16x256xf32>
    %19 = arith.addf %9, %18 : vector<16x256xf32>
    %20 = vector.extract_strided_slice %7 {offsets = [0, 256], sizes = [16, 256], strides = [1, 1]} : vector<16x1792xf32> to vector<16x256xf32>
    %c2_i32 = arith.constant 2 : i32
    %21 = tpu.dynamic_rotate %20 by %c2_i32 dim 0 : vector<16x256xf32>, i32 -> vector<16x256xf32>
    %c2_i32_8 = arith.constant 2 : i32
    %22 = vector.broadcast %c2_i32_8 : i32 to vector<16x256xi32>
    %23 = arith.cmpi sge, %8, %22 : vector<16x256xi32>
    %c16_i32_9 = arith.constant 16 : i32
    %24 = vector.broadcast %c16_i32_9 : i32 to vector<16x256xi32>
    %25 = arith.cmpi slt, %8, %24 : vector<16x256xi32>
    %26 = arith.andi %23, %25 : vector<16x256xi1>
    %cst_10 = arith.constant 0.000000e+00 : f32
    %27 = vector.broadcast %cst_10 : f32 to vector<16x256xf32>
    %28 = arith.select %26, %21, %27 : vector<16x256xi1>, vector<16x256xf32>
    %29 = arith.addf %19, %28 : vector<16x256xf32>
    %30 = vector.extract_strided_slice %7 {offsets = [0, 512], sizes = [16, 256], strides = [1, 1]} : vector<16x1792xf32> to vector<16x256xf32>
    %c1_i32 = arith.constant 1 : i32
    %31 = tpu.dynamic_rotate %30 by %c1_i32 dim 0 : vector<16x256xf32>, i32 -> vector<16x256xf32>
    %c1_i32_11 = arith.constant 1 : i32
    %32 = vector.broadcast %c1_i32_11 : i32 to vector<16x256xi32>
    %33 = arith.cmpi sge, %8, %32 : vector<16x256xi32>
    %c16_i32_12 = arith.constant 16 : i32
    %34 = vector.broadcast %c16_i32_12 : i32 to vector<16x256xi32>
    %35 = arith.cmpi slt, %8, %34 : vector<16x256xi32>
    %36 = arith.andi %33, %35 : vector<16x256xi1>
    %cst_13 = arith.constant 0.000000e+00 : f32
    %37 = vector.broadcast %cst_13 : f32 to vector<16x256xf32>
    %38 = arith.select %36, %31, %37 : vector<16x256xi1>, vector<16x256xf32>
    %39 = arith.addf %29, %38 : vector<16x256xf32>
    %40 = vector.extract_strided_slice %7 {offsets = [0, 768], sizes = [16, 256], strides = [1, 1]} : vector<16x1792xf32> to vector<16x256xf32>
    %41 = arith.addf %39, %40 : vector<16x256xf32>
    %42 = vector.extract_strided_slice %7 {offsets = [0, 1024], sizes = [16, 256], strides = [1, 1]} : vector<16x1792xf32> to vector<16x256xf32>
    %c15_i32 = arith.constant 15 : i32
    %43 = tpu.dynamic_rotate %42 by %c15_i32 dim 0 : vector<16x256xf32>, i32 -> vector<16x256xf32>
    %c0_i32_14 = arith.constant 0 : i32
    %44 = vector.broadcast %c0_i32_14 : i32 to vector<16x256xi32>
    %45 = arith.cmpi sge, %8, %44 : vector<16x256xi32>
    %c15_i32_15 = arith.constant 15 : i32
    %46 = vector.broadcast %c15_i32_15 : i32 to vector<16x256xi32>
    %47 = arith.cmpi slt, %8, %46 : vector<16x256xi32>
    %48 = arith.andi %45, %47 : vector<16x256xi1>
    %cst_16 = arith.constant 0.000000e+00 : f32
    %49 = vector.broadcast %cst_16 : f32 to vector<16x256xf32>
    %50 = arith.select %48, %43, %49 : vector<16x256xi1>, vector<16x256xf32>
    %51 = arith.addf %41, %50 : vector<16x256xf32>
    %52 = vector.extract_strided_slice %7 {offsets = [0, 1280], sizes = [16, 256], strides = [1, 1]} : vector<16x1792xf32> to vector<16x256xf32>
    %c14_i32 = arith.constant 14 : i32
    %53 = tpu.dynamic_rotate %52 by %c14_i32 dim 0 : vector<16x256xf32>, i32 -> vector<16x256xf32>
    %c0_i32_17 = arith.constant 0 : i32
    %54 = vector.broadcast %c0_i32_17 : i32 to vector<16x256xi32>
    %55 = arith.cmpi sge, %8, %54 : vector<16x256xi32>
    %c14_i32_18 = arith.constant 14 : i32
    %56 = vector.broadcast %c14_i32_18 : i32 to vector<16x256xi32>
    %57 = arith.cmpi slt, %8, %56 : vector<16x256xi32>
    %58 = arith.andi %55, %57 : vector<16x256xi1>
    %cst_19 = arith.constant 0.000000e+00 : f32
    %59 = vector.broadcast %cst_19 : f32 to vector<16x256xf32>
    %60 = arith.select %58, %53, %59 : vector<16x256xi1>, vector<16x256xf32>
    %61 = arith.addf %51, %60 : vector<16x256xf32>
    %62 = vector.extract_strided_slice %7 {offsets = [0, 1536], sizes = [16, 256], strides = [1, 1]} : vector<16x1792xf32> to vector<16x256xf32>
    %c13_i32 = arith.constant 13 : i32
    %63 = tpu.dynamic_rotate %62 by %c13_i32 dim 0 : vector<16x256xf32>, i32 -> vector<16x256xf32>
    %c0_i32_20 = arith.constant 0 : i32
    %64 = vector.broadcast %c0_i32_20 : i32 to vector<16x256xi32>
    %65 = arith.cmpi sge, %8, %64 : vector<16x256xi32>
    %c13_i32_21 = arith.constant 13 : i32
    %66 = vector.broadcast %c13_i32_21 : i32 to vector<16x256xi32>
    %67 = arith.cmpi slt, %8, %66 : vector<16x256xi32>
    %68 = arith.andi %65, %67 : vector<16x256xi1>
    %cst_22 = arith.constant 0.000000e+00 : f32
    %69 = vector.broadcast %cst_22 : f32 to vector<16x256xf32>
    %70 = arith.select %68, %63, %69 : vector<16x256xi1>, vector<16x256xf32>
    %71 = arith.addf %61, %70 : vector<16x256xf32>
    %c0_i32_23 = arith.constant 0 : i32
    %72 = arith.cmpi eq, %arg0, %c0_i32_23 : i32
    %73 = arith.extui %72 : i1 to i32
    %c0_i32_24 = arith.constant 0 : i32
    %74 = arith.cmpi ne, %73, %c0_i32_24 : i32
    scf.if %74 {
      %c0_29 = arith.constant 0 : index
      %c0_30 = arith.constant 0 : index
      %81 = vector.load %arg5[%c0_29, %c0_30] : memref<4x256xf32, #tpu.memory_space<vmem>>, vector<1x256xf32>
      %82 = vector.broadcast %81 : vector<1x256xf32> to vector<16x256xf32>
      %83 = arith.addf %71, %82 : vector<16x256xf32>
      %c0_31 = arith.constant 0 : index
      %c0_32 = arith.constant 0 : index
      %84 = vector.load %arg1[%c0_31, %c0_32] : memref<16x256xf32, #tpu.memory_space<vmem>>, vector<16x256xf32>
      %85 = arith.addf %83, %84 : vector<16x256xf32>
      %c0_33 = arith.constant 0 : index
      %c0_34 = arith.constant 0 : index
      %86 = vector.load %arg8[%c0_33, %c0_34] : memref<16x256xf32, #tpu.memory_space<vmem>>, vector<16x256xf32>
      tpu.vector_store %arg8[%c0_33, %c0_34], %85 {strides = array<i32>} : memref<16x256xf32, #tpu.memory_space<vmem>>, vector<16x256xf32>,
    } else {
    }
    %c1_i32_25 = arith.constant 1 : i32
    %75 = arith.cmpi eq, %arg0, %c1_i32_25 : i32
    %76 = arith.extui %75 : i1 to i32
    %c0_i32_26 = arith.constant 0 : i32
    %77 = arith.cmpi ne, %76, %c0_i32_26 : i32
    scf.if %77 {
      %c1 = arith.constant 1 : index
      %c0_29 = arith.constant 0 : index
      %81 = vector.load %arg5[%c1, %c0_29] : memref<4x256xf32, #tpu.memory_space<vmem>>, vector<1x256xf32>
      %82 = vector.broadcast %81 : vector<1x256xf32> to vector<16x256xf32>
      %83 = arith.addf %71, %82 : vector<16x256xf32>
      %c0_30 = arith.constant 0 : index
      %c0_31 = arith.constant 0 : index
      %84 = vector.load %arg2[%c0_30, %c0_31] : memref<16x256xf32, #tpu.memory_space<vmem>>, vector<16x256xf32>
      %85 = arith.addf %83, %84 : vector<16x256xf32>
      %c0_32 = arith.constant 0 : index
      %c0_33 = arith.constant 0 : index
      %86 = vector.load %arg8[%c0_32, %c0_33] : memref<16x256xf32, #tpu.memory_space<vmem>>, vector<16x256xf32>
      tpu.vector_store %arg8[%c0_32, %c0_33], %85 {strides = array<i32>} : memref<16x256xf32, #tpu.memory_space<vmem>>, vector<16x256xf32>,
    } else {
    }
    %c2_i32_27 = arith.constant 2 : i32
    %78 = arith.cmpi eq, %arg0, %c2_i32_27 : i32
    %79 = arith.extui %78 : i1 to i32
    %c0_i32_28 = arith.constant 0 : i32
    %80 = arith.cmpi ne, %79, %c0_i32_28 : i32
    scf.if %80 {
      %c2 = arith.constant 2 : index
      %c0_29 = arith.constant 0 : index
      %81 = vector.load %arg5[%c2, %c0_29] : memref<4x256xf32, #tpu.memory_space<vmem>>, vector<1x256xf32>
      %82 = vector.broadcast %81 : vector<1x256xf32> to vector<16x256xf32>
      %83 = arith.addf %71, %82 : vector<16x256xf32>
      %cst_30 = arith.constant 0.000000e+00 : f32
      %84 = vector.broadcast %cst_30 : f32 to vector<16x256xf32>
      %85 = arith.maximumf %83, %84 : vector<16x256xf32>
      %86 = arith.truncf %85 : vector<16x256xf32> to vector<16x256xbf16>
      %c0_31 = arith.constant 0 : index
      %c0_32 = arith.constant 0 : index
      %87 = vector.load %arg6[%c0_31, %c0_32] : memref<256x256xbf16, #tpu.memory_space<vmem>>, vector<256x256xbf16>
      %cst_33 = arith.constant dense<0.000000e+00> : vector<16x256xf32>
      %88 = tpu.matmul %86, %87, %cst_33 {dimension_numbers = #tpu.dot_dimension_numbers<[1], [0], [0], [1], [0, 0, 1, 1], [], []>} : vector<16x256xbf16>, vector<256x256xbf16>, vector<16x256xf32> -> vector<16x256xf32>
      %c3 = arith.constant 3 : index
      %c0_34 = arith.constant 0 : index
      %89 = vector.load %arg5[%c3, %c0_34] : memref<4x256xf32, #tpu.memory_space<vmem>>, vector<1x256xf32>
      %90 = vector.broadcast %89 : vector<1x256xf32> to vector<16x256xf32>
      %91 = arith.addf %88, %90 : vector<16x256xf32>
      %c0_35 = arith.constant 0 : index
      %c0_36 = arith.constant 0 : index
      %92 = vector.load %arg1[%c0_35, %c0_36] : memref<16x256xf32, #tpu.memory_space<vmem>>, vector<16x256xf32>
      %93 = arith.addf %92, %91 : vector<16x256xf32>
      %c0_37 = arith.constant 0 : index
      %c0_38 = arith.constant 0 : index
      %94 = vector.load %arg3[%c0_37, %c0_38] : memref<16x256xf32, #tpu.memory_space<vmem>>, vector<16x256xf32>
      %95 = arith.addf %93, %94 : vector<16x256xf32>
      %cst_39 = arith.constant 0.000000e+00 : f32
      %96 = vector.broadcast %cst_39 : f32 to vector<16x256xf32>
      %97 = arith.maximumf %95, %96 : vector<16x256xf32>
      %c0_40 = arith.constant 0 : index
      %c0_41 = arith.constant 0 : index
      %98 = vector.load %arg7[%c0_40, %c0_41] : memref<16x256xf32, #tpu.memory_space<vmem>>, vector<16x256xf32>
      tpu.vector_store %arg7[%c0_40, %c0_41], %97 {strides = array<i32>} : memref<16x256xf32, #tpu.memory_space<vmem>>, vector<16x256xf32>,
    } else {
    }
    return
  }
  func.func @transform_0(%arg0: i32) -> (i32, i32) {
    %c0_i32 = arith.constant 0 : i32
    %c0_i32_0 = arith.constant 0 : i32
    %c0_i32_1 = arith.constant 0 : i32
    return %c0_i32, %c0_i32_0 : i32, i32
  }
  func.func @transform_1(%arg0: i32) -> (i32, i32) {
    %c0_i32 = arith.constant 0 : i32
    %c0_i32_0 = arith.constant 0 : i32
    %c0_i32_1 = arith.constant 0 : i32
    return %c0_i32, %c0_i32_0 : i32, i32
  }
  func.func @transform_2(%arg0: i32) -> (i32, i32) {
    %c0_i32 = arith.constant 0 : i32
    %c0_i32_0 = arith.constant 0 : i32
    %c0_i32_1 = arith.constant 0 : i32
    return %c0_i32, %c0_i32_0 : i32, i32
  }
  func.func @transform_3(%arg0: i32) -> (i32, i32, i32) {
    %c0_i32 = arith.constant 0 : i32
    %c0_i32_0 = arith.constant 0 : i32
    %c0_i32_1 = arith.constant 0 : i32
    return %arg0, %c0_i32, %c0_i32_0 : i32, i32, i32
  }
  func.func @transform_4(%arg0: i32) -> (i32, i32) {
    %c0_i32 = arith.constant 0 : i32
    %c0_i32_0 = arith.constant 0 : i32
    %c0_i32_1 = arith.constant 0 : i32
    return %c0_i32, %c0_i32_0 : i32, i32
  }
  func.func @transform_5(%arg0: i32) -> (i32, i32) {
    %c0_i32 = arith.constant 0 : i32
    %c0_i32_0 = arith.constant 0 : i32
    %c0_i32_1 = arith.constant 0 : i32
    return %c0_i32, %c0_i32_0 : i32, i32
  }
  func.func @transform_6(%arg0: i32) -> (i32, i32) {
    %c0_i32 = arith.constant 0 : i32
    %c0_i32_0 = arith.constant 0 : i32
    %c0_i32_1 = arith.constant 0 : i32
    return %c0_i32, %c0_i32_0 : i32, i32
  }
}

</mosaic_0001>

<llo_original>
// kernel: tile.7
$region0: #{tile.7}
  %s0 = inlined_call_operand.vmem [shape: f32[16,16,1,1,16], index: 0, kind: input, shape index: {}]
  %s1 = inlined_call_operand.vmem [shape: f32[16,256], index: 1, kind: output, shape index: {}]
  %v2 = vld [vmem:[%s0] ss:$8 sm:$0xf]
  %v3 = vld [vmem:[%s0] ss:$8 sm:$0xf0]
  %vm4 = vcmask 1047556
  %v5 = vsel %vm4, %v3, %v2
  %vm6 = vcmask 130048
  %7 = vst.msk [vmem:[%s1] ss:$8 sm:$0x3] %vm6, %v5
  %s8 = scalar_lea.vmem %s1, 4294967281
  %9 = vst.msk [vmem:[%s8] ss:$8 sm:$0xc] %vm6, %v5
  %s10 = scalar_lea.vmem %s1, 4294967266
  %11 = vst.msk [vmem:[%s10] ss:$8 sm:$0x30] %vm6, %v5
  %s12 = scalar_lea.vmem %s1, 4294967251
  %13 = vst.msk [vmem:[%s12] ss:$8 sm:$0xc0] %vm6, %v5
  %s14 = scalar_lea.vmem %s0, 64
  %v15 = vld [vmem:[%s14] ss:$8 sm:$0xf]
  %s16 = scalar_lea.vmem %s0, 64
  %v17 = vld [vmem:[%s16] ss:$8 sm:$0xf0]
  %vm18 = vcmask 1047556
  %v19 = vsel %vm18, %v17, %v15
  %vm20 = vcmask 130048
  %s21 = scalar_lea.vmem %s1, 4
  %22 = vst.msk [vmem:[%s21] ss:$8 sm:$0x3] %vm20, %v19
  %s23 = scalar_lea.vmem %s1, 4294967285
  %24 = vst.msk [vmem:[%s23] ss:$8 sm:$0xc] %vm20, %v19
  %s25 = scalar_lea.vmem %s1, 4294967270
  %26 = vst.msk [vmem:[%s25] ss:$8 sm:$0x30] %vm20, %v19
  %s27 = scalar_lea.vmem %s1, 4294967255
  %28 = vst.msk [vmem:[%s27] ss:$8 sm:$0xc0] %vm20, %v19
  %s29 = scalar_lea.vmem %s0, 128
  %v30 = vld [vmem:[%s29] ss:$8 sm:$0xf]
  %s31 = scalar_lea.vmem %s0, 128
  %v32 = vld [vmem:[%s31] ss:$8 sm:$0xf0]
  %vm33 = vcmask 1047556
  %v34 = vsel %vm33, %v32, %v30
  %vm35 = vcmask 130048
  %s36 = scalar_lea.vmem %s1, 16
  %37 = vst.msk [vmem:[%s36] ss:$8 sm:$0x3] %vm35, %v34
  %s38 = scalar_lea.vmem %s1, 1
  %39 = vst.msk [vmem:[%s38] ss:$8 sm:$0xc] %vm35, %v34
  %s40 = scalar_lea.vmem %s1, 4294967282
  %41 = vst.msk [vmem:[%s40] ss:$8 sm:$0x30] %vm35, %v34
  %s42 = scalar_lea.vmem %s1, 4294967267
  %43 = vst.msk [vmem:[%s42] ss:$8 sm:$0xc0] %vm35, %v34
  %s44 = scalar_lea.vmem %s0, 192
  %v45 = vld [vmem:[%s44] ss:$8 sm:$0xf]
  %s46 = scalar_lea.vmem %s0, 192
  %v47 = vld [vmem:[%s46] ss:$8 sm:$0xf0]
  %vm48 = vcmask 1047556
  %v49 = vsel %vm48, %v47, %v45
  %vm50 = vcmask 130048
  %s51 = scalar_lea.vmem %s1, 20
  %52 = vst.msk [vmem:[%s51] ss:$8 sm:$0x3] %vm50, %v49
  %s53 = scalar_lea.vmem %s1, 5
  %54 = vst.msk [vmem:[%s53] ss:$8 sm:$0xc] %vm50, %v49
  %s55 = scalar_lea.vmem %s1, 4294967286
  %56 = vst.msk [vmem:[%s55] ss:$8 sm:$0x30] %vm50, %v49
  %s57 = scalar_lea.vmem %s1, 4294967271
  %58 = vst.msk [vmem:[%s57] ss:$8 sm:$0xc0] %vm50, %v49
  %s59 = scalar_lea.vmem %s0, 7
  %s60 = smov 3
  %v61 = vld [vmem:[%s59] ss:$16 sm:%s60]
  %s62 = scalar_lea.vmem %s0, 7
  %s63 = smov 12
  %v64 = vld [vmem:[%s62] ss:$16 sm:%s63]
  %vm65 = vcmask 1043458
  %v66 = vsel %vm65, %v64, %v61
  %s67 = scalar_lea.vmem %s0, 7
  %s68 = smov 48
  %v69 = vld [vmem:[%s67] ss:$16 sm:%s68]
  %vm70 = vcmask 1045508
  %v71 = vsel %vm70, %v69, %v66
  %s72 = scalar_lea.vmem %s0, 7
  %s73 = smov 192
  %v74 = vld [vmem:[%s72] ss:$16 sm:%s73]
  %vm75 = vcmask 1047558
  %v76 = vsel %vm75, %v74, %v71
  %77 = vrot.lane.b32.xlu0 %v76, 112
  %v78 = vpop.permute.xlu0 %77
  %vm79 = vcmask 1048448
  %80 = vst.msk [vmem:[%s1] sm:$0xff] %vm79, %v78
  %s81 = scalar_lea.vmem %s0, 15
  %s82 = smov 3
  %v83 = vld [vmem:[%s81] ss:$16 sm:%s82]
  %s84 = scalar_lea.vmem %s0, 15
  %s85 = smov 12
  %v86 = vld [vmem:[%s84] ss:$16 sm:%s85]
  %vm87 = vcmask 1043458
  %v88 = vsel %vm87, %v86, %v83
  %s89 = scalar_lea.vmem %s0, 15
  %s90 = smov 48
  %v91 = vld [vmem:[%s89] ss:$16 sm:%s90]
  %vm92 = vcmask 1045508
  %v93 = vsel %vm92, %v91, %v88
  %s94 = scalar_lea.vmem %s0, 15
  %s95 = smov 192
  %v96 = vld [vmem:[%s94] ss:$16 sm:%s95]
  %vm97 = vcmask 1047558
  %v98 = vsel %vm97, %v96, %v93
  %99 = vrot.lane.b32.xlu0 %v98, 112
  %v100 = vpop.permute.xlu0 %99
  %vm101 = vcmask 1048448
  %s102 = scalar_lea.vmem %s1, 8
  %103 = vst.msk [vmem:[%s102] sm:$0xff] %vm101, %v100
  %s104 = scalar_lea.vmem %s0, 135
  %s105 = smov 3
  %v106 = vld [vmem:[%s104] ss:$16 sm:%s105]
  %s107 = scalar_lea.vmem %s0, 135
  %s108 = smov 12
  %v109 = vld [vmem:[%s107] ss:$16 sm:%s108]
  %vm110 = vcmask 1043458
  %v111 = vsel %vm110, %v109, %v106
  %s112 = scalar_lea.vmem %s0, 135
  %s113 = smov 48
  %v114 = vld [vmem:[%s112] ss:$16 sm:%s113]
  %vm115 = vcmask 1045508
  %v116 = vsel %vm115, %v114, %v111
  %s117 = scalar_lea.vmem %s0, 135
  %s118 = smov 192
  %v119 = vld [vmem:[%s117] ss:$16 sm:%s118]
  %vm120 = vcmask 1047558
  %v121 = vsel %vm120, %v119, %v116
  %122 = vrot.lane.b32.xlu0 %v121, 112
  %v123 = vpop.permute.xlu0 %122
  %vm124 = vcmask 1048448
  %s125 = scalar_lea.vmem %s1, 16
  %126 = vst.msk [vmem:[%s125] sm:$0xff] %vm124, %v123
  %s127 = scalar_lea.vmem %s0, 143
  %s128 = smov 3
  %v129 = vld [vmem:[%s127] ss:$16 sm:%s128]
  %s130 = scalar_lea.vmem %s0, 143
  %s131 = smov 12
  %v132 = vld [vmem:[%s130] ss:$16 sm:%s131]
  %vm133 = vcmask 1043458
  %v134 = vsel %vm133, %v132, %v129
  %s135 = scalar_lea.vmem %s0, 143
  %s136 = smov 48
  %v137 = vld [vmem:[%s135] ss:$16 sm:%s136]
  %vm138 = vcmask 1045508
  %v139 = vsel %vm138, %v137, %v134
  %s140 = scalar_lea.vmem %s0, 143
  %s141 = smov 192
  %v142 = vld [vmem:[%s140] ss:$16 sm:%s141]
  %vm143 = vcmask 1047558
  %v144 = vsel %vm143, %v142, %v139
  %145 = vrot.lane.b32.xlu0 %v144, 112
  %v146 = vpop.permute.xlu0 %145
  %vm147 = vcmask 1048448
  %s148 = scalar_lea.vmem %s1, 24
  %149 = vst.msk [vmem:[%s148] sm:$0xff] %vm147, %v146
  %s150 = scalar_lea.vmem %s0, 6
  %s151 = smov 3
  %v152 = vld [vmem:[%s150] ss:$16 sm:%s151]
  %s153 = scalar_lea.vmem %s0, 6
  %s154 = smov 12
  %v155 = vld [vmem:[%s153] ss:$16 sm:%s154]
  %vm156 = vcmask 1043458
  %v157 = vsel %vm156, %v155, %v152
  %s158 = scalar_lea.vmem %s0, 6
  %s159 = smov 48
  %v160 = vld [vmem:[%s158] ss:$16 sm:%s159]
  %vm161 = vcmask 1045508
  %v162 = vsel %vm161, %v160, %v157
  %s163 = scalar_lea.vmem %s0, 6
  %s164 = smov 192
  %v165 = vld [vmem:[%s163] ss:$16 sm:%s164]
  %vm166 = vcmask 1047558
  %v167 = vsel %vm166, %v165, %v162
  %168 = vrot.lane.b32.xlu0 %v167, 96
  %v169 = vpop.permute.xlu0 %168
  %vm170 = vcmask 917248
  %171 = vst.msk [vmem:[%s1] sm:$0xff] %vm170, %v169
  %s172 = scalar_lea.vmem %s0, 14
  %s173 = smov 3
  %v174 = vld [vmem:[%s172] ss:$16 sm:%s173]
  %s175 = scalar_lea.vmem %s0, 14
  %s176 = smov 12
  %v177 = vld [vmem:[%s175] ss:$16 sm:%s176]
  %vm178 = vcmask 1043458
  %v179 = vsel %vm178, %v177, %v174
  %s180 = scalar_lea.vmem %s0, 14
  %s181 = smov 48
  %v182 = vld [vmem:[%s180] ss:$16 sm:%s181]
  %vm183 = vcmask 1045508
  %v184 = vsel %vm183, %v182, %v179
  %s185 = scalar_lea.vmem %s0, 14
  %s186 = smov 192
  %v187 = vld [vmem:[%s185] ss:$16 sm:%s186]
  %vm188 = vcmask 1047558
  %v189 = vsel %vm188, %v187, %v184
  %190 = vrot.lane.b32.xlu0 %v189, 96
  %v191 = vpop.permute.xlu0 %190
  %vm192 = vcmask 917248
  %s193 = scalar_lea.vmem %s1, 8
  %194 = vst.msk [vmem:[%s193] sm:$0xff] %vm192, %v191
  %s195 = scalar_lea.vmem %s0, 134
  %s196 = smov 3
  %v197 = vld [vmem:[%s195] ss:$16 sm:%s196]
  %s198 = scalar_lea.vmem %s0, 134
  %s199 = smov 12
  %v200 = vld [vmem:[%s198] ss:$16 sm:%s199]
  %vm201 = vcmask 1043458
  %v202 = vsel %vm201, %v200, %v197
  %s203 = scalar_lea.vmem %s0, 134
  %s204 = smov 48
  %v205 = vld [vmem:[%s203] ss:$16 sm:%s204]
  %vm206 = vcmask 1045508
  %v207 = vsel %vm206, %v205, %v202
  %s208 = scalar_lea.vmem %s0, 134
  %s209 = smov 192
  %v210 = vld [vmem:[%s208] ss:$16 sm:%s209]
  %vm211 = vcmask 1047558
  %v212 = vsel %vm211, %v210, %v207
  %213 = vrot.lane.b32.xlu0 %v212, 96
  %v214 = vpop.permute.xlu0 %213
  %vm215 = vcmask 917248
  %s216 = scalar_lea.vmem %s1, 16
  %217 = vst.msk [vmem:[%s216] sm:$0xff] %vm215, %v214
  %s218 = scalar_lea.vmem %s0, 142
  %s219 = smov 3
  %v220 = vld [vmem:[%s218] ss:$16 sm:%s219]
  %s221 = scalar_lea.vmem %s0, 142
  %s222 = smov 12
  %v223 = vld [vmem:[%s221] ss:$16 sm:%s222]
  %vm224 = vcmask 1043458
  %v225 = vsel %vm224, %v223, %v220
  %s226 = scalar_lea.vmem %s0, 142
  %s227 = smov 48
  %v228 = vld [vmem:[%s226] ss:$16 sm:%s227]
  %vm229 = vcmask 1045508
  %v230 = vsel %vm229, %v228, %v225
  %s231 = scalar_lea.vmem %s0, 142
  %s232 = smov 192
  %v233 = vld [vmem:[%s231] ss:$16 sm:%s232]
  %vm234 = vcmask 1047558
  %v235 = vsel %vm234, %v233, %v230
  %236 = vrot.lane.b32.xlu0 %v235, 96
  %v237 = vpop.permute.xlu0 %236
  %vm238 = vcmask 917248
  %s239 = scalar_lea.vmem %s1, 24
  %240 = vst.msk [vmem:[%s239] sm:$0xff] %vm238, %v237
  %s241 = scalar_lea.vmem %s0, 5
  %s242 = smov 3
  %v243 = vld [vmem:[%s241] ss:$16 sm:%s242]
  %s244 = scalar_lea.vmem %s0, 5
  %s245 = smov 12
  %v246 = vld [vmem:[%s244] ss:$16 sm:%s245]
  %vm247 = vcmask 1043458
  %v248 = vsel %vm247, %v246, %v243
  %s249 = scalar_lea.vmem %s0, 5
  %s250 = smov 48
  %v251 = vld [vmem:[%s249] ss:$16 sm:%s250]
  %vm252 = vcmask 1045508
  %v253 = vsel %vm252, %v251, %v248
  %s254 = scalar_lea.vmem %s0, 5
  %s255 = smov 192
  %v256 = vld [vmem:[%s254] ss:$16 sm:%s255]
  %vm257 = vcmask 1047558
  %v258 = vsel %vm257, %v256, %v253
  %259 = vrot.lane.b32.xlu0 %v258, 80
  %v260 = vpop.permute.xlu0 %259
  %vm261 = vcmask 786048
  %262 = vst.msk [vmem:[%s1] sm:$0xff] %vm261, %v260
  %s263 = scalar_lea.vmem %s0, 13
  %s264 = smov 3
  %v265 = vld [vmem:[%s263] ss:$16 sm:%s264]
  %s266 = scalar_lea.vmem %s0, 13
  %s267 = smov 12
  %v268 = vld [vmem:[%s266] ss:$16 sm:%s267]
  %vm269 = vcmask 1043458
  %v270 = vsel %vm269, %v268, %v265
  %s271 = scalar_lea.vmem %s0, 13
  %s272 = smov 48
  %v273 = vld [vmem:[%s271] ss:$16 sm:%s272]
  %vm274 = vcmask 1045508
  %v275 = vsel %vm274, %v273, %v270
  %s276 = scalar_lea.vmem %s0, 13
  %s277 = smov 192
  %v278 = vld [vmem:[%s276] ss:$16 sm:%s277]
  %vm279 = vcmask 1047558
  %v280 = vsel %vm279, %v278, %v275
  %281 = vrot.lane.b32.xlu0 %v280, 80
  %v282 = vpop.permute.xlu0 %281
  %vm283 = vcmask 786048
  %s284 = scalar_lea.vmem %s1, 8
  %285 = vst.msk [vmem:[%s284] sm:$0xff] %vm283, %v282
  %s286 = scalar_lea.vmem %s0, 133
  %s287 = smov 3
  %v288 = vld [vmem:[%s286] ss:$16 sm:%s287]
  %s289 = scalar_lea.vmem %s0, 133
  %s290 = smov 12
  %v291 = vld [vmem:[%s289] ss:$16 sm:%s290]
  %vm292 = vcmask 1043458
  %v293 = vsel %vm292, %v291, %v288
  %s294 = scalar_lea.vmem %s0, 133
  %s295 = smov 48
  %v296 = vld [vmem:[%s294] ss:$16 sm:%s295]
  %vm297 = vcmask 1045508
  %v298 = vsel %vm297, %v296, %v293
  %s299 = scalar_lea.vmem %s0, 133
  %s300 = smov 192
  %v301 = vld [vmem:[%s299] ss:$16 sm:%s300]
  %vm302 = vcmask 1047558
  %v303 = vsel %vm302, %v301, %v298
  %304 = vrot.lane.b32.xlu0 %v303, 80
  %v305 = vpop.permute.xlu0 %304
  %vm306 = vcmask 786048
  %s307 = scalar_lea.vmem %s1, 16
  %308 = vst.msk [vmem:[%s307] sm:$0xff] %vm306, %v305
  %s309 = scalar_lea.vmem %s0, 141
  %s310 = smov 3
  %v311 = vld [vmem:[%s309] ss:$16 sm:%s310]
  %s312 = scalar_lea.vmem %s0, 141
  %s313 = smov 12
  %v314 = vld [vmem:[%s312] ss:$16 sm:%s313]
  %vm315 = vcmask 1043458
  %v316 = vsel %vm315, %v314, %v311
  %s317 = scalar_lea.vmem %s0, 141
  %s318 = smov 48
  %v319 = vld [vmem:[%s317] ss:$16 sm:%s318]
  %vm320 = vcmask 1045508
  %v321 = vsel %vm320, %v319, %v316
  %s322 = scalar_lea.vmem %s0, 141
  %s323 = smov 192
  %v324 = vld [vmem:[%s322] ss:$16 sm:%s323]
  %vm325 = vcmask 1047558
  %v326 = vsel %vm325, %v324, %v321
  %327 = vrot.lane.b32.xlu0 %v326, 80
  %v328 = vpop.permute.xlu0 %327
  %vm329 = vcmask 786048
  %s330 = scalar_lea.vmem %s1, 24
  %331 = vst.msk [vmem:[%s330] sm:$0xff] %vm329, %v328
  %s332 = scalar_lea.vmem %s0, 4
  %s333 = smov 3
  %v334 = vld [vmem:[%s332] ss:$16 sm:%s333]
  %s335 = scalar_lea.vmem %s0, 4
  %s336 = smov 12
  %v337 = vld [vmem:[%s335] ss:$16 sm:%s336]
  %vm338 = vcmask 1043458
  %v339 = vsel %vm338, %v337, %v334
  %s340 = scalar_lea.vmem %s0, 4
  %s341 = smov 48
  %v342 = vld [vmem:[%s340] ss:$16 sm:%s341]
  %vm343 = vcmask 1045508
  %v344 = vsel %vm343, %v342, %v339
  %s345 = scalar_lea.vmem %s0, 4
  %s346 = smov 192
  %v347 = vld [vmem:[%s345] ss:$16 sm:%s346]
  %vm348 = vcmask 1047558
  %v349 = vsel %vm348, %v347, %v344
  %350 = vrot.lane.b32.xlu0 %v349, 64
  %v351 = vpop.permute.xlu0 %350
  %vm352 = vcmask 654848
  %353 = vst.msk [vmem:[%s1] sm:$0xff] %vm352, %v351
  %s354 = scalar_lea.vmem %s0, 12
  %s355 = smov 3
  %v356 = vld [vmem:[%s354] ss:$16 sm:%s355]
  %s357 = scalar_lea.vmem %s0, 12
  %s358 = smov 12
  %v359 = vld [vmem:[%s357] ss:$16 sm:%s358]
  %vm360 = vcmask 1043458
  %v361 = vsel %vm360, %v359, %v356
  %s362 = scalar_lea.vmem %s0, 12
  %s363 = smov 48
  %v364 = vld [vmem:[%s362] ss:$16 sm:%s363]
  %vm365 = vcmask 1045508
  %v366 = vsel %vm365, %v364, %v361
  %s367 = scalar_lea.vmem %s0, 12
  %s368 = smov 192
  %v369 = vld [vmem:[%s367] ss:$16 sm:%s368]
  %vm370 = vcmask 1047558
  %v371 = vsel %vm370, %v369, %v366
  %372 = vrot.lane.b32.xlu0 %v371, 64
  %v373 = vpop.permute.xlu0 %372
  %vm374 = vcmask 654848
  %s375 = scalar_lea.vmem %s1, 8
  %376 = vst.msk [vmem:[%s375] sm:$0xff] %vm374, %v373
  %s377 = scalar_lea.vmem %s0, 132
  %s378 = smov 3
  %v379 = vld [vmem:[%s377] ss:$16 sm:%s378]
  %s380 = scalar_lea.vmem %s0, 132
  %s381 = smov 12
  %v382 = vld [vmem:[%s380] ss:$16 sm:%s381]
  %vm383 = vcmask 1043458
  %v384 = vsel %vm383, %v382, %v379
  %s385 = scalar_lea.vmem %s0, 132
  %s386 = smov 48
  %v387 = vld [vmem:[%s385] ss:$16 sm:%s386]
  %vm388 = vcmask 1045508
  %v389 = vsel %vm388, %v387, %v384
  %s390 = scalar_lea.vmem %s0, 132
  %s391 = smov 192
  %v392 = vld [vmem:[%s390] ss:$16 sm:%s391]
  %vm393 = vcmask 1047558
  %v394 = vsel %vm393, %v392, %v389
  %395 = vrot.lane.b32.xlu0 %v394, 64
  %v396 = vpop.permute.xlu0 %395
  %vm397 = vcmask 654848
  %s398 = scalar_lea.vmem %s1, 16
  %399 = vst.msk [vmem:[%s398] sm:$0xff] %vm397, %v396
  %s400 = scalar_lea.vmem %s0, 140
  %s401 = smov 3
  %v402 = vld [vmem:[%s400] ss:$16 sm:%s401]
  %s403 = scalar_lea.vmem %s0, 140
  %s404 = smov 12
  %v405 = vld [vmem:[%s403] ss:$16 sm:%s404]
  %vm406 = vcmask 1043458
  %v407 = vsel %vm406, %v405, %v402
  %s408 = scalar_lea.vmem %s0, 140
  %s409 = smov 48
  %v410 = vld [vmem:[%s408] ss:$16 sm:%s409]
  %vm411 = vcmask 1045508
  %v412 = vsel %vm411, %v410, %v407
  %s413 = scalar_lea.vmem %s0, 140
  %s414 = smov 192
  %v415 = vld [vmem:[%s413] ss:$16 sm:%s414]
  %vm416 = vcmask 1047558
  %v417 = vsel %vm416, %v415, %v412
  %418 = vrot.lane.b32.xlu0 %v417, 64
  %v419 = vpop.permute.xlu0 %418
  %vm420 = vcmask 654848
  %s421 = scalar_lea.vmem %s1, 24
  %422 = vst.msk [vmem:[%s421] sm:$0xff] %vm420, %v419
  %s423 = scalar_lea.vmem %s0, 3
  %s424 = smov 3
  %v425 = vld [vmem:[%s423] ss:$16 sm:%s424]
  %s426 = scalar_lea.vmem %s0, 3
  %s427 = smov 12
  %v428 = vld [vmem:[%s426] ss:$16 sm:%s427]
  %vm429 = vcmask 1043458
  %v430 = vsel %vm429, %v428, %v425
  %s431 = scalar_lea.vmem %s0, 3
  %s432 = smov 48
  %v433 = vld [vmem:[%s431] ss:$16 sm:%s432]
  %vm434 = vcmask 1045508
  %v435 = vsel %vm434, %v433, %v430
  %s436 = scalar_lea.vmem %s0, 3
  %s437 = smov 192
  %v438 = vld [vmem:[%s436] ss:$16 sm:%s437]
  %vm439 = vcmask 1047558
  %v440 = vsel %vm439, %v438, %v435
  %441 = vrot.lane.b32.xlu0 %v440, 48
  %v442 = vpop.permute.xlu0 %441
  %vm443 = vcmask 523648
  %444 = vst.msk [vmem:[%s1] sm:$0xff] %vm443, %v442
  %s445 = scalar_lea.vmem %s0, 11
  %s446 = smov 3
  %v447 = vld [vmem:[%s445] ss:$16 sm:%s446]
  %s448 = scalar_lea.vmem %s0, 11
  %s449 = smov 12
  %v450 = vld [vmem:[%s448] ss:$16 sm:%s449]
  %vm451 = vcmask 1043458
  %v452 = vsel %vm451, %v450, %v447
  %s453 = scalar_lea.vmem %s0, 11
  %s454 = smov 48
  %v455 = vld [vmem:[%s453] ss:$16 sm:%s454]
  %vm456 = vcmask 1045508
  %v457 = vsel %vm456, %v455, %v452
  %s458 = scalar_lea.vmem %s0, 11
  %s459 = smov 192
  %v460 = vld [vmem:[%s458] ss:$16 sm:%s459]
  %vm461 = vcmask 1047558
  %v462 = vsel %vm461, %v460, %v457
  %463 = vrot.lane.b32.xlu0 %v462, 48
  %v464 = vpop.permute.xlu0 %463
  %vm465 = vcmask 523648
  %s466 = scalar_lea.vmem %s1, 8
  %467 = vst.msk [vmem:[%s466] sm:$0xff] %vm465, %v464
  %s468 = scalar_lea.vmem %s0, 131
  %s469 = smov 3
  %v470 = vld [vmem:[%s468] ss:$16 sm:%s469]
  %s471 = scalar_lea.vmem %s0, 131
  %s472 = smov 12
  %v473 = vld [vmem:[%s471] ss:$16 sm:%s472]
  %vm474 = vcmask 1043458
  %v475 = vsel %vm474, %v473, %v470
  %s476 = scalar_lea.vmem %s0, 131
  %s477 = smov 48
  %v478 = vld [vmem:[%s476] ss:$16 sm:%s477]
  %vm479 = vcmask 1045508
  %v480 = vsel %vm479, %v478, %v475
  %s481 = scalar_lea.vmem %s0, 131
  %s482 = smov 192
  %v483 = vld [vmem:[%s481] ss:$16 sm:%s482]
  %vm484 = vcmask 1047558
  %v485 = vsel %vm484, %v483, %v480
  %486 = vrot.lane.b32.xlu0 %v485, 48
  %v487 = vpop.permute.xlu0 %486
  %vm488 = vcmask 523648
  %s489 = scalar_lea.vmem %s1, 16
  %490 = vst.msk [vmem:[%s489] sm:$0xff] %vm488, %v487
  %s491 = scalar_lea.vmem %s0, 139
  %s492 = smov 3
  %v493 = vld [vmem:[%s491] ss:$16 sm:%s492]
  %s494 = scalar_lea.vmem %s0, 139
  %s495 = smov 12
  %v496 = vld [vmem:[%s494] ss:$16 sm:%s495]
  %vm497 = vcmask 1043458
  %v498 = vsel %vm497, %v496, %v493
  %s499 = scalar_lea.vmem %s0, 139
  %s500 = smov 48
  %v501 = vld [vmem:[%s499] ss:$16 sm:%s500]
  %vm502 = vcmask 1045508
  %v503 = vsel %vm502, %v501, %v498
  %s504 = scalar_lea.vmem %s0, 139
  %s505 = smov 192
  %v506 = vld [vmem:[%s504] ss:$16 sm:%s505]
  %vm507 = vcmask 1047558
  %v508 = vsel %vm507, %v506, %v503
  %509 = vrot.lane.b32.xlu0 %v508, 48
  %v510 = vpop.permute.xlu0 %509
  %vm511 = vcmask 523648
  %s512 = scalar_lea.vmem %s1, 24
  %513 = vst.msk [vmem:[%s512] sm:$0xff] %vm511, %v510
  %s514 = scalar_lea.vmem %s0, 2
  %s515 = smov 3
  %v516 = vld [vmem:[%s514] ss:$16 sm:%s515]
  %s517 = scalar_lea.vmem %s0, 2
  %s518 = smov 12
  %v519 = vld [vmem:[%s517] ss:$16 sm:%s518]
  %vm520 = vcmask 1043458
  %v521 = vsel %vm520, %v519, %v516
  %s522 = scalar_lea.vmem %s0, 2
  %s523 = smov 48
  %v524 = vld [vmem:[%s522] ss:$16 sm:%s523]
  %vm525 = vcmask 1045508
  %v526 = vsel %vm525, %v524, %v521
  %s527 = scalar_lea.vmem %s0, 2
  %s528 = smov 192
  %v529 = vld [vmem:[%s527] ss:$16 sm:%s528]
  %vm530 = vcmask 1047558
  %v531 = vsel %vm530, %v529, %v526
  %532 = vrot.lane.b32.xlu0 %v531, 32
  %v533 = vpop.permute.xlu0 %532
  %vm534 = vcmask 392448
  %535 = vst.msk [vmem:[%s1] sm:$0xff] %vm534, %v533
  %s536 = scalar_lea.vmem %s0, 10
  %s537 = smov 3
  %v538 = vld [vmem:[%s536] ss:$16 sm:%s537]
  %s539 = scalar_lea.vmem %s0, 10
  %s540 = smov 12
  %v541 = vld [vmem:[%s539] ss:$16 sm:%s540]
  %vm542 = vcmask 1043458
  %v543 = vsel %vm542, %v541, %v538
  %s544 = scalar_lea.vmem %s0, 10
  %s545 = smov 48
  %v546 = vld [vmem:[%s544] ss:$16 sm:%s545]
  %vm547 = vcmask 1045508
  %v548 = vsel %vm547, %v546, %v543
  %s549 = scalar_lea.vmem %s0, 10
  %s550 = smov 192
  %v551 = vld [vmem:[%s549] ss:$16 sm:%s550]
  %vm552 = vcmask 1047558
  %v553 = vsel %vm552, %v551, %v548
  %554 = vrot.lane.b32.xlu0 %v553, 32
  %v555 = vpop.permute.xlu0 %554
  %vm556 = vcmask 392448
  %s557 = scalar_lea.vmem %s1, 8
  %558 = vst.msk [vmem:[%s557] sm:$0xff] %vm556, %v555
  %s559 = scalar_lea.vmem %s0, 130
  %s560 = smov 3
  %v561 = vld [vmem:[%s559] ss:$16 sm:%s560]
  %s562 = scalar_lea.vmem %s0, 130
  %s563 = smov 12
  %v564 = vld [vmem:[%s562] ss:$16 sm:%s563]
  %vm565 = vcmask 1043458
  %v566 = vsel %vm565, %v564, %v561
  %s567 = scalar_lea.vmem %s0, 130
  %s568 = smov 48
  %v569 = vld [vmem:[%s567] ss:$16 sm:%s568]
  %vm570 = vcmask 1045508
  %v571 = vsel %vm570, %v569, %v566
  %s572 = scalar_lea.vmem %s0, 130
  %s573 = smov 192
  %v574 = vld [vmem:[%s572] ss:$16 sm:%s573]
  %vm575 = vcmask 1047558
  %v576 = vsel %vm575, %v574, %v571
  %577 = vrot.lane.b32.xlu0 %v576, 32
  %v578 = vpop.permute.xlu0 %577
  %vm579 = vcmask 392448
  %s580 = scalar_lea.vmem %s1, 16
  %581 = vst.msk [vmem:[%s580] sm:$0xff] %vm579, %v578
  %s582 = scalar_lea.vmem %s0, 138
  %s583 = smov 3
  %v584 = vld [vmem:[%s582] ss:$16 sm:%s583]
  %s585 = scalar_lea.vmem %s0, 138
  %s586 = smov 12
  %v587 = vld [vmem:[%s585] ss:$16 sm:%s586]
  %vm588 = vcmask 1043458
  %v589 = vsel %vm588, %v587, %v584
  %s590 = scalar_lea.vmem %s0, 138
  %s591 = smov 48
  %v592 = vld [vmem:[%s590] ss:$16 sm:%s591]
  %vm593 = vcmask 1045508
  %v594 = vsel %vm593, %v592, %v589
  %s595 = scalar_lea.vmem %s0, 138
  %s596 = smov 192
  %v597 = vld [vmem:[%s595] ss:$16 sm:%s596]
  %vm598 = vcmask 1047558
  %v599 = vsel %vm598, %v597, %v594
  %600 = vrot.lane.b32.xlu0 %v599, 32
  %v601 = vpop.permute.xlu0 %600
  %vm602 = vcmask 392448
  %s603 = scalar_lea.vmem %s1, 24
  %604 = vst.msk [vmem:[%s603] sm:$0xff] %vm602, %v601
  %s605 = scalar_lea.vmem %s0, 1
  %s606 = smov 3
  %v607 = vld [vmem:[%s605] ss:$16 sm:%s606]
  %s608 = scalar_lea.vmem %s0, 1
  %s609 = smov 12
  %v610 = vld [vmem:[%s608] ss:$16 sm:%s609]
  %vm611 = vcmask 1043458
  %v612 = vsel %vm611, %v610, %v607
  %s613 = scalar_lea.vmem %s0, 1
  %s614 = smov 48
  %v615 = vld [vmem:[%s613] ss:$16 sm:%s614]
  %vm616 = vcmask 1045508
  %v617 = vsel %vm616, %v615, %v612
  %s618 = scalar_lea.vmem %s0, 1
  %s619 = smov 192
  %v620 = vld [vmem:[%s618] ss:$16 sm:%s619]
  %vm621 = vcmask 1047558
  %v622 = vsel %vm621, %v620, %v617
  %623 = vrot.lane.b32.xlu0 %v622, 16
  %v624 = vpop.permute.xlu0 %623
  %vm625 = vcmask 261248
  %626 = vst.msk [vmem:[%s1] sm:$0xff] %vm625, %v624
  %s627 = scalar_lea.vmem %s0, 9
  %s628 = smov 3
  %v629 = vld [vmem:[%s627] ss:$16 sm:%s628]
  %s630 = scalar_lea.vmem %s0, 9
  %s631 = smov 12
  %v632 = vld [vmem:[%s630] ss:$16 sm:%s631]
  %vm633 = vcmask 1043458
  %v634 = vsel %vm633, %v632, %v629
  %s635 = scalar_lea.vmem %s0, 9
  %s636 = smov 48
  %v637 = vld [vmem:[%s635] ss:$16 sm:%s636]
  %vm638 = vcmask 1045508
  %v639 = vsel %vm638, %v637, %v634
  %s640 = scalar_lea.vmem %s0, 9
  %s641 = smov 192
  %v642 = vld [vmem:[%s640] ss:$16 sm:%s641]
  %vm643 = vcmask 1047558
  %v644 = vsel %vm643, %v642, %v639
  %645 = vrot.lane.b32.xlu0 %v644, 16
  %v646 = vpop.permute.xlu0 %645
  %vm647 = vcmask 261248
  %s648 = scalar_lea.vmem %s1, 8
  %649 = vst.msk [vmem:[%s648] sm:$0xff] %vm647, %v646
  %s650 = scalar_lea.vmem %s0, 129
  %s651 = smov 3
  %v652 = vld [vmem:[%s650] ss:$16 sm:%s651]
  %s653 = scalar_lea.vmem %s0, 129
  %s654 = smov 12
  %v655 = vld [vmem:[%s653] ss:$16 sm:%s654]
  %vm656 = vcmask 1043458
  %v657 = vsel %vm656, %v655, %v652
  %s658 = scalar_lea.vmem %s0, 129
  %s659 = smov 48
  %v660 = vld [vmem:[%s658] ss:$16 sm:%s659]
  %vm661 = vcmask 1045508
  %v662 = vsel %vm661, %v660, %v657
  %s663 = scalar_lea.vmem %s0, 129
  %s664 = smov 192
  %v665 = vld [vmem:[%s663] ss:$16 sm:%s664]
  %vm666 = vcmask 1047558
  %v667 = vsel %vm666, %v665, %v662
  %668 = vrot.lane.b32.xlu0 %v667, 16
  %v669 = vpop.permute.xlu0 %668
  %vm670 = vcmask 261248
  %s671 = scalar_lea.vmem %s1, 16
  %672 = vst.msk [vmem:[%s671] sm:$0xff] %vm670, %v669
  %s673 = scalar_lea.vmem %s0, 137
  %s674 = smov 3
  %v675 = vld [vmem:[%s673] ss:$16 sm:%s674]
  %s676 = scalar_lea.vmem %s0, 137
  %s677 = smov 12
  %v678 = vld [vmem:[%s676] ss:$16 sm:%s677]
  %vm679 = vcmask 1043458
  %v680 = vsel %vm679, %v678, %v675
  %s681 = scalar_lea.vmem %s0, 137
  %s682 = smov 48
  %v683 = vld [vmem:[%s681] ss:$16 sm:%s682]
  %vm684 = vcmask 1045508
  %v685 = vsel %vm684, %v683, %v680
  %s686 = scalar_lea.vmem %s0, 137
  %s687 = smov 192
  %v688 = vld [vmem:[%s686] ss:$16 sm:%s687]
  %vm689 = vcmask 1047558
  %v690 = vsel %vm689, %v688, %v685
  %691 = vrot.lane.b32.xlu0 %v690, 16
  %v692 = vpop.permute.xlu0 %691
  %vm693 = vcmask 261248
  %s694 = scalar_lea.vmem %s1, 24
  %695 = vst.msk [vmem:[%s694] sm:$0xff] %vm693, %v692

// kernel: _model_forward.1
$region0: #{_model_forward.1}
  #allocation0 [shape = 'u32[]', space=smem, size = 0x4, offset = 0x4, fixed_abs, tag = 'smem constant byte address 0x4 - core index']
  #allocation1 [shape = 'u32[144,128]{1,0:T(1,128)}', space=vmem, size = 0x12000, scoped, tag = 'internal scratch']
  #allocation2 [shape = 'f32[16,256]{1,0:T(8,128)}', space=vmem, size = 0x4000, scoped, tag = 'scratch operand']
  %s0 = inlined_call_operand.vmem [shape: f32[16,256], index: 0, kind: input, shape index: {}]
  %s1 = inlined_call_operand.vmem [shape: f32[16,256], index: 1, kind: input, shape index: {}]
  %s2 = inlined_call_operand.vmem [shape: f32[16,256], index: 2, kind: input, shape index: {}]
  %s3 = inlined_call_operand.hbm [shape: bf16[3,256,1792], index: 3, kind: input, shape index: {}]
  %s4 = inlined_call_operand.hbm [shape: f32[4,256], index: 4, kind: input, shape index: {}]
  %s5 = inlined_call_operand.hbm [shape: bf16[256,256], index: 5, kind: input, shape index: {}]
  %s6 = inlined_call_operand.vmem [shape: f32[16,256], index: 6, kind: output, shape index: {}]
  %s7 = sld [smem:[#allocation0]]
  $region85: #{_model_forward.1} parent=0
    _
  %s9 = ssub.s32 1, %s7
  %s10 = scalar_select 0, %s9, %s7
  $region1: #{_model_forward.1} parent=0
    #allocation3 [shape = 'u8[1835008]{0}', space=vmem, size = 0x1c0000, scoped, tag = 'input window, operand 3']
    #allocation4 [shape = 's32[2]{0}', space=sflag, size = 0x8, scoped, tag = 'scoped memory for _model_forward.1']
    #allocation5 [shape = 'u8[4096]{0}', space=vmem, size = 0x1000, scoped, tag = 'input window, operand 4, single buffered']
    #allocation6 [shape = 's32[1]{0}', space=sflag, size = 0x4, scoped, tag = 'scoped memory for _model_forward.1']
    #allocation7 [shape = 'u8[131072]{0}', space=vmem, size = 0x20000, scoped, tag = 'input window, operand 5, single buffered']
    %11 = vsyncpa [#allocation4], 0
    %s12 = scalar_lea.sflag [#allocation4], 1
    %13 = vsyncpa %s12, 0
    %14 = vsyncpa [#allocation6], 0
    loop: start=0, step=1, limit=5
    $region2: #{_model_forward.1} parent=1 // loop_pre_header
      _
    $region3: #{_model_forward.1} parent=1 // loop_header
      %s16 = sphi 0, %s20
      %p17 = scmp.ge.s32.totalorder %s16, 5
      %s24 = sphi 0, %s24
      %s26 = sphi 0, %s24
      %s27 = sphi 0, %s26
      %s41 = sphi 0, %s27
      %s45 = sphi 0, %s45
      %s47 = sphi 0, %s45
      %s48 = sphi 0, %s47
      %s62 = sphi 0, %s48
      %s66 = sphi 0, %s66
      %s68 = sphi 0, %s66
      %s69 = sphi 0, %s68
      %s83 = sphi 0, %s69
      %s89 = sphi 0, %s91
      %s92 = sphi 0, %s89
      %s93 = sphi 0, %s92
      %s109 = sphi 0, %s93
      %s113 = sphi 0, %s113
      %s115 = sphi 0, %s113
      %s116 = sphi 0, %s115
      %s130 = sphi 0, %s116
      %s134 = sphi 0, %s134
      %s136 = sphi 0, %s134
      %s137 = sphi 0, %s136
      %s151 = sphi 0, %s137
      %s155 = sphi 0, %s155
      %s157 = sphi 0, %s155
      %s158 = sphi 0, %s157
      %s172 = sphi 0, %s158
    $region4: #{_model_forward.1} parent=1 // loop_header_branch
      %19 = sbr.rel (%p17) target = $region8
    $region5: #{_model_forward.1} parent=1 // loop_body
      %s21 = ssub.s32 %s16, 1
      %s22 = ssub.s32 %s16, 2
      %s23 = sadd.s32 %s16, 1
      %s25 = sadd.s32 %s24, 1
      %p28 = scmp.eq.s32.totalorder %s16, 2
      %p29 = scmp.ne.s32.totalorder %s24, %s26
      %p30 = scmp.eq.s32.totalorder %s16, 0
      %p31 = por %p29, %p30
      %p32 = scmp.ne.s32.totalorder %s24, %s26
      %p33 = scmp.eq.s32.totalorder %s21, 2
      %p34 = por %p32, %p33
      %p35 = scmp.ne.s32.totalorder %s26, %s27
      %p36 = scmp.eq.s32.totalorder %s21, 0
      %p37 = por %p35, %p36
      %p38 = scmp.ne.s32.totalorder %s26, %s27
      %p39 = scmp.eq.s32.totalorder %s22, 2
      %p40 = por %p38, %p39
      %p42 = scmp.ne.s32.totalorder %s27, %s41
      %p43 = scmp.eq.s32.totalorder %s22, 0
      %p44 = por %p42, %p43
      %s46 = sadd.s32 %s45, 1
      %p49 = scmp.eq.s32.totalorder %s16, 2
      %p50 = scmp.ne.s32.totalorder %s45, %s47
      %p51 = scmp.eq.s32.totalorder %s16, 0
      %p52 = por %p50, %p51
      %p53 = scmp.ne.s32.totalorder %s45, %s47
      %p54 = scmp.eq.s32.totalorder %s21, 2
      %p55 = por %p53, %p54
      %p56 = scmp.ne.s32.totalorder %s47, %s48
      %p57 = scmp.eq.s32.totalorder %s21, 0
      %p58 = por %p56, %p57
      %p59 = scmp.ne.s32.totalorder %s47, %s48
      %p60 = scmp.eq.s32.totalorder %s22, 2
      %p61 = por %p59, %p60
      %p63 = scmp.ne.s32.totalorder %s48, %s62
      %p64 = scmp.eq.s32.totalorder %s22, 0
      %p65 = por %p63, %p64
      %s67 = sadd.s32 %s66, 1
      %p70 = scmp.eq.s32.totalorder %s16, 2
      %p71 = scmp.ne.s32.totalorder %s66, %s68
      %p72 = scmp.eq.s32.totalorder %s16, 0
      %p73 = por %p71, %p72
      %p74 = scmp.ne.s32.totalorder %s66, %s68
      %p75 = scmp.eq.s32.totalorder %s21, 2
      %p76 = por %p74, %p75
      %p77 = scmp.ne.s32.totalorder %s68, %s69
      %p78 = scmp.eq.s32.totalorder %s21, 0
      %p79 = por %p77, %p78
      %p80 = scmp.ne.s32.totalorder %s68, %s69
      %p81 = scmp.eq.s32.totalorder %s22, 2
      %p82 = por %p80, %p81
      %p84 = scmp.ne.s32.totalorder %s69, %s83
      %p85 = scmp.eq.s32.totalorder %s22, 0
      %p86 = por %p84, %p85
      %s87 = ssub.s32 %s16, %s23
      %p88 = scmp.eq.s32.totalorder %s87, 0
      %s90 = sadd.s32 %s89, 1
      %s91 = scalar_select %p88, %s89, %s90
      %p94 = pneg %p88
      %p95 = scmp.eq.s32.totalorder %s16, 2
      %p96 = por %p94, %p95
      %p97 = scmp.ne.s32.totalorder %s89, %s92
      %p98 = scmp.eq.s32.totalorder %s16, 0
      %p99 = por %p97, %p98
      %p100 = scmp.ne.s32.totalorder %s89, %s92
      %p101 = scmp.eq.s32.totalorder %s21, 2
      %p102 = por %p100, %p101
      %p103 = scmp.ne.s32.totalorder %s92, %s93
      %p104 = scmp.eq.s32.totalorder %s21, 0
      %p105 = por %p103, %p104
      %p106 = scmp.ne.s32.totalorder %s92, %s93
      %p107 = scmp.eq.s32.totalorder %s22, 2
      %p108 = por %p106, %p107
      %p110 = scmp.ne.s32.totalorder %s93, %s109
      %p111 = scmp.eq.s32.totalorder %s22, 0
      %p112 = por %p110, %p111
      %s114 = sadd.s32 %s113, 1
      %p117 = scmp.eq.s32.totalorder %s16, 2
      %p118 = scmp.ne.s32.totalorder %s113, %s115
      %p119 = scmp.eq.s32.totalorder %s16, 0
      %p120 = por %p118, %p119
      %p121 = scmp.ne.s32.totalorder %s113, %s115
      %p122 = scmp.eq.s32.totalorder %s21, 2
      %p123 = por %p121, %p122
      %p124 = scmp.ne.s32.totalorder %s115, %s116
      %p125 = scmp.eq.s32.totalorder %s21, 0
      %p126 = por %p124, %p125
      %p127 = scmp.ne.s32.totalorder %s115, %s116
      %p128 = scmp.eq.s32.totalorder %s22, 2
      %p129 = por %p127, %p128
      %p131 = scmp.ne.s32.totalorder %s116, %s130
      %p132 = scmp.eq.s32.totalorder %s22, 0
      %p133 = por %p131, %p132
      %s135 = sadd.s32 %s134, 1
      %p138 = scmp.eq.s32.totalorder %s16, 2
      %p139 = scmp.ne.s32.totalorder %s134, %s136
      %p140 = scmp.eq.s32.totalorder %s16, 0
      %p141 = por %p139, %p140
      %p142 = scmp.ne.s32.totalorder %s134, %s136
      %p143 = scmp.eq.s32.totalorder %s21, 2
      %p144 = por %p142, %p143
      %p145 = scmp.ne.s32.totalorder %s136, %s137
      %p146 = scmp.eq.s32.totalorder %s21, 0
      %p147 = por %p145, %p146
      %p148 = scmp.ne.s32.totalorder %s136, %s137
      %p149 = scmp.eq.s32.totalorder %s22, 2
      %p150 = por %p148, %p149
      %p152 = scmp.ne.s32.totalorder %s137, %s151
      %p153 = scmp.eq.s32.totalorder %s22, 0
      %p154 = por %p152, %p153
      %s156 = sadd.s32 %s155, 1
      %p159 = scmp.eq.s32.totalorder %s16, 2
      %p160 = scmp.ne.s32.totalorder %s155, %s157
      %p161 = scmp.eq.s32.totalorder %s16, 0
      %p162 = por %p160, %p161
      %p163 = scmp.ne.s32.totalorder %s155, %s157
      %p164 = scmp.eq.s32.totalorder %s21, 2
      %p165 = por %p163, %p164
      %p166 = scmp.ne.s32.totalorder %s157, %s158
      %p167 = scmp.eq.s32.totalorder %s21, 0
      %p168 = por %p166, %p167
      %p169 = scmp.ne.s32.totalorder %s157, %s158
      %p170 = scmp.eq.s32.totalorder %s22, 2
      %p171 = por %p169, %p170
      %p173 = scmp.ne.s32.totalorder %s158, %s172
      %p174 = scmp.eq.s32.totalorder %s22, 0
      %p175 = por %p173, %p174
      %p176 = scmp.le.s32.totalorder 1, %s16
      %p177 = scmp.lt.s32.totalorder %s16, 4
      %p178 = pnand %p176, %p177
      %p179 = pneg %p178
      // Predicated region
      $region9: #{_model_forward.1} parent=5 // pred_check
        _
      $region10: #{_model_forward.1} parent=5 // pred_check_branch
        %181 = sbr.rel (%p178) target = $region12
      $region11: #{_model_forward.1} parent=5 // pred_region
        %s182 = ssub.s32 %s16, 1
        // Predicated region
        $region13: #{_model_forward.1} parent=11 // pred_check
          %p183 = pneg %p37
        $region14: #{_model_forward.1} parent=11 // pred_check_branch
          %185 = sbr.rel (%p183) target = $region16
        $region15: #{_model_forward.1} parent=11 // pred_region
          _
        $region16: #{_model_forward.1} parent=11 // pred_fallthru
          _
        // Predicated region
        $region17: #{_model_forward.1} parent=11 // pred_check
          %p186 = pneg %p58
        $region18: #{_model_forward.1} parent=11 // pred_check_branch
          %188 = sbr.rel (%p186) target = $region20
        $region19: #{_model_forward.1} parent=11 // pred_region
          _
        $region20: #{_model_forward.1} parent=11 // pred_fallthru
          _
        // Predicated region
        $region21: #{_model_forward.1} parent=11 // pred_check
          %p189 = pneg %p79
        $region22: #{_model_forward.1} parent=11 // pred_check_branch
          %191 = sbr.rel (%p189) target = $region24
        $region23: #{_model_forward.1} parent=11 // pred_region
          _
        $region24: #{_model_forward.1} parent=11 // pred_fallthru
          _
        // Predicated region
        $region25: #{_model_forward.1} parent=11 // pred_check
          %p192 = pneg %p126
        $region26: #{_model_forward.1} parent=11 // pred_check_branch
          %194 = sbr.rel (%p192) target = $region28
        $region27: #{_model_forward.1} parent=11 // pred_region
          %s196 = ssub.s32 128, 128
          %197 = vsyncadd [#allocation6], %s196
          %s199 = sshll.u32 [#allocation5], 4
          %s200 = int_to_ptr.vmem [resolvable:$true] %s199
          %202 = dma.hbm_to_vmem [thread:$0]  %s4, 128, %s200, [#allocation6]
        $region28: #{_model_forward.1} parent=11 // pred_fallthru
          _
        // Predicated region
        $region29: #{_model_forward.1} parent=11 // pred_check
          %p203 = pneg %p147
        $region30: #{_model_forward.1} parent=11 // pred_check_branch
          %205 = sbr.rel (%p203) target = $region32
        $region31: #{_model_forward.1} parent=11 // pred_region
          %s207 = ssub.s32 4096, 4096
          %208 = vsyncadd [#allocation6], %s207
          %s209 = sshll.u32 [#allocation7], 4
          %s210 = int_to_ptr.vmem [resolvable:$true] %s209
          %215 = dma.hbm_to_vmem [thread:$0]  %s5, 4096, %s210, [#allocation6], 128, 128, 8
        $region32: #{_model_forward.1} parent=11 // pred_fallthru
          _
      $region12: #{_model_forward.1} parent=5 // pred_fallthru
        _
      %p216 = scmp.lt.s32.totalorder %s16, 3
      // Predicated region
      $region33: #{_model_forward.1} parent=5 // pred_check
        %p217 = pneg %p216
      $region34: #{_model_forward.1} parent=5 // pred_check_branch
        %219 = sbr.rel (%p217) target = $region36
      $region35: #{_model_forward.1} parent=5 // pred_region
        // Predicated region
        $region37: #{_model_forward.1} parent=35 // pred_check
          %p220 = pneg %p99
        $region38: #{_model_forward.1} parent=35 // pred_check_branch
          %222 = sbr.rel (%p220) target = $region40
        $region39: #{_model_forward.1} parent=35 // pred_region
          %s223 = sand.u32 %s89, 1
          %s224 = scalar_lea.sflag [#allocation4], %s223
          %s225 = sand.u32 %s89, 1
          %s226 = smul.addr %s225, 1792
          %s227 = scalar_lea.vmem [#allocation3], %s226
          %s229 = ssub.s32 28672, 28672
          %230 = vsyncadd %s224, %s229
          %s231 = smul.addr %s16, 448
          %s232 = smul.addr %s231, 64
          %s233 = scalar_lea.hbm %s3, %s232
          %s234 = sshll.u32 %s227, 4
          %s235 = int_to_ptr.vmem [resolvable:$true] %s234
          %240 = dma.hbm_to_vmem [thread:$0]  %s233, 28672, %s235, %s224, 896, 896, 56
        $region40: #{_model_forward.1} parent=35 // pred_fallthru
          _
      $region36: #{_model_forward.1} parent=5 // pred_fallthru
        _
      %p241 = scmp.le.s32.totalorder 1, %s16
      %p242 = scmp.lt.s32.totalorder %s16, 4
      %p243 = pnand %p241, %p242
      %p244 = pneg %p243
      // Predicated region
      $region41: #{_model_forward.1} parent=5 // pred_check
        _
      $region42: #{_model_forward.1} parent=5 // pred_check_branch
        %246 = sbr.rel (%p243) target = $region44
      $region43: #{_model_forward.1} parent=5 // pred_region
        %s247 = ssub.s32 %s16, 1
        %s248 = sand.u32 %s92, 1
        %s249 = scalar_lea.sflag [#allocation4], %s248
        %s250 = sand.u32 %s92, 1
        %s251 = smul.addr %s250, 1792
        %s252 = scalar_lea.vmem [#allocation3], %s251
        // Predicated region
        $region45: #{_model_forward.1} parent=43 // pred_check
          %p253 = pneg %p105
        $region46: #{_model_forward.1} parent=43 // pred_check_branch
          %255 = sbr.rel (%p253) target = $region48
        $region47: #{_model_forward.1} parent=43 // pred_region
          %256 = dma.done %s249, 28672
        $region48: #{_model_forward.1} parent=43 // pred_fallthru
          _
        // Predicated region
        $region49: #{_model_forward.1} parent=43 // pred_check
          %p257 = pneg %p126
        $region50: #{_model_forward.1} parent=43 // pred_check_branch
          %259 = sbr.rel (%p257) target = $region52
        $region51: #{_model_forward.1} parent=43 // pred_region
          %260 = dma.done [#allocation6], 128
        $region52: #{_model_forward.1} parent=43 // pred_fallthru
          _
        // Predicated region
        $region53: #{_model_forward.1} parent=43 // pred_check
          %p261 = pneg %p147
        $region54: #{_model_forward.1} parent=43 // pred_check_branch
          %263 = sbr.rel (%p261) target = $region56
        $region55: #{_model_forward.1} parent=43 // pred_region
          %264 = dma.done [#allocation6], 4096
        $region56: #{_model_forward.1} parent=43 // pred_fallthru
          _
        %p265 = pneg %p37
        %p266 = pneg %p34
        %p267 = pneg %p58
        %p268 = pneg %p55
        %p269 = pneg %p79
        %p270 = pneg %p76
        %s271 = sand.u32 %s92, 1
        %s272 = scalar_lea.sflag [#allocation4], %s271
        %s273 = sand.u32 %s92, 1
        %s274 = smul.addr %s273, 1792
        %s275 = scalar_lea.vmem [#allocation3], %s274
        %p276 = pneg %p105
        %p277 = pneg %p102
        %p278 = pneg %p126
        %p279 = pneg %p123
        %p280 = pneg %p147
        %p281 = pneg %p144
        %p282 = pneg %p168
        %p283 = pneg %p165
        %p284 = scmp.eq.s32.totalorder %s21, 0
        // Predicated region
        $region57: #{_model_forward.1} parent=43 // pred_check
          %p285 = pneg %p284
        $region58: #{_model_forward.1} parent=43 // pred_check_branch
          %287 = sbr.rel (%p285) target = $region60
        $region59: #{_model_forward.1} parent=43 // pred_region
          %v288 = vld [vmem:[%s0] sm:$0xff]
          %v289 = vld [vmem:[%s0 + $0x8] sm:$0xff]
          %v290 = vld [vmem:[%s0 + $0x10] sm:$0xff]
          %v291 = vld [vmem:[%s0 + $0x18] sm:$0xff]
          %292 = vst [vmem:[#allocation2] sm:$0xff] %v288
          %293 = vst [vmem:[#allocation2 + $0x8] sm:$0xff] %v289
          %294 = vst [vmem:[#allocation2 + $0x10] sm:$0xff] %v290
          %295 = vst [vmem:[#allocation2 + $0x18] sm:$0xff] %v291
        $region60: #{_model_forward.1} parent=43 // pred_fallthru
          _
        %v296 = vld [vmem:[#allocation2] sm:$0xff]
        %v297 = vld [vmem:[#allocation2 + $0x8] sm:$0xff]
        %v298 = vld [vmem:[#allocation2 + $0x10] sm:$0xff]
        %v299 = vld [vmem:[#allocation2 + $0x18] sm:$0xff]
        %v300 = vpack.c.bf16 %v298, %v296
        %v301 = vpack.c.bf16 %v299, %v297
        %v302 = vld [vmem:[%s252] sm:$0xff]
        %v303 = vld [vmem:[%s252 + $0x8] sm:$0xff]
        %v304 = vld [vmem:[%s252 + $0x10] sm:$0xff]
        %v305 = vld [vmem:[%s252 + $0x18] sm:$0xff]
        %v306 = vld [vmem:[%s252 + $0x20] sm:$0xff]
        %v307 = vld [vmem:[%s252 + $0x28] sm:$0xff]
        %v308 = vld [vmem:[%s252 + $0x30] sm:$0xff]
        %v309 = vld [vmem:[%s252 + $0x38] sm:$0xff]
        %v310 = vld [vmem:[%s252 + $0x40] sm:$0xff]
        %v311 = vld [vmem:[%s252 + $0x48] sm:$0xff]
        %v312 = vld [vmem:[%s252 + $0x50] sm:$0xff]
        %v313 = vld [vmem:[%s252 + $0x58] sm:$0xff]
        %v314 = vld [vmem:[%s252 + $0x60] sm:$0xff]
        %v315 = vld [vmem:[%s252 + $0x68] sm:$0xff]
        %v316 = vld [vmem:[%s252 + $0x70] sm:$0xff]
        %v317 = vld [vmem:[%s252 + $0x78] sm:$0xff]
        %v318 = vld [vmem:[%s252 + $0x80] sm:$0xff]
        %v319 = vld [vmem:[%s252 + $0x88] sm:$0xff]
        %v320 = vld [vmem:[%s252 + $0x90] sm:$0xff]
        %v321 = vld [vmem:[%s252 + $0x98] sm:$0xff]
        %v322 = vld [vmem:[%s252 + $0xa0] sm:$0xff]
        %v323 = vld [vmem:[%s252 + $0xa8] sm:$0xff]
        %v324 = vld [vmem:[%s252 + $0xb0] sm:$0xff]
        %v325 = vld [vmem:[%s252 + $0xb8] sm:$0xff]
        %v326 = vld [vmem:[%s252 + $0xc0] sm:$0xff]
        %v327 = vld [vmem:[%s252 + $0xc8] sm:$0xff]
        %v328 = vld [vmem:[%s252 + $0xd0] sm:$0xff]
        %v329 = vld [vmem:[%s252 + $0xd8] sm:$0xff]
        %v330 = vld [vmem:[%s252 + $0xe0] sm:$0xff]
        %v331 = vld [vmem:[%s252 + $0xe8] sm:$0xff]
        %v332 = vld [vmem:[%s252 + $0xf0] sm:$0xff]
        %v333 = vld [vmem:[%s252 + $0xf8] sm:$0xff]
        %v334 = vld [vmem:[%s252 + $0x100] sm:$0xff]
        %v335 = vld [vmem:[%s252 + $0x108] sm:$0xff]
        %v336 = vld [vmem:[%s252 + $0x110] sm:$0xff]
        %v337 = vld [vmem:[%s252 + $0x118] sm:$0xff]
        %v338 = vld [vmem:[%s252 + $0x120] sm:$0xff]
        %v339 = vld [vmem:[%s252 + $0x128] sm:$0xff]
        %v340 = vld [vmem:[%s252 + $0x130] sm:$0xff]
        %v341 = vld [vmem:[%s252 + $0x138] sm:$0xff]
        %v342 = vld [vmem:[%s252 + $0x140] sm:$0xff]
        %v343 = vld [vmem:[%s252 + $0x148] sm:$0xff]
        %v344 = vld [vmem:[%s252 + $0x150] sm:$0xff]
        %v345 = vld [vmem:[%s252 + $0x158] sm:$0xff]
        %v346 = vld [vmem:[%s252 + $0x160] sm:$0xff]
        %v347 = vld [vmem:[%s252 + $0x168] sm:$0xff]
        %v348 = vld [vmem:[%s252 + $0x170] sm:$0xff]
        %v349 = vld [vmem:[%s252 + $0x178] sm:$0xff]
        %v350 = vld [vmem:[%s252 + $0x180] sm:$0xff]
        %v351 = vld [vmem:[%s252 + $0x188] sm:$0xff]
        %v352 = vld [vmem:[%s252 + $0x190] sm:$0xff]
        %v353 = vld [vmem:[%s252 + $0x198] sm:$0xff]
        %v354 = vld [vmem:[%s252 + $0x1a0] sm:$0xff]
        %v355 = vld [vmem:[%s252 + $0x1a8] sm:$0xff]
        %v356 = vld [vmem:[%s252 + $0x1b0] sm:$0xff]
        %v357 = vld [vmem:[%s252 + $0x1b8] sm:$0xff]
        %v358 = vld [vmem:[%s252 + $0x1c0] sm:$0xff]
        %v359 = vld [vmem:[%s252 + $0x1c8] sm:$0xff]
        %v360 = vld [vmem:[%s252 + $0x1d0] sm:$0xff]
        %v361 = vld [vmem:[%s252 + $0x1d8] sm:$0xff]
        %v362 = vld [vmem:[%s252 + $0x1e0] sm:$0xff]
        %v363 = vld [vmem:[%s252 + $0x1e8] sm:$0xff]
        %v364 = vld [vmem:[%s252 + $0x1f0] sm:$0xff]
        %v365 = vld [vmem:[%s252 + $0x1f8] sm:$0xff]
        %v366 = vld [vmem:[%s252 + $0x200] sm:$0xff]
        %v367 = vld [vmem:[%s252 + $0x208] sm:$0xff]
        %v368 = vld [vmem:[%s252 + $0x210] sm:$0xff]
        %v369 = vld [vmem:[%s252 + $0x218] sm:$0xff]
        %v370 = vld [vmem:[%s252 + $0x220] sm:$0xff]
        %v371 = vld [vmem:[%s252 + $0x228] sm:$0xff]
        %v372 = vld [vmem:[%s252 + $0x230] sm:$0xff]
        %v373 = vld [vmem:[%s252 + $0x238] sm:$0xff]
        %v374 = vld [vmem:[%s252 + $0x240] sm:$0xff]
        %v375 = vld [vmem:[%s252 + $0x248] sm:$0xff]
        %v376 = vld [vmem:[%s252 + $0x250] sm:$0xff]
        %v377 = vld [vmem:[%s252 + $0x258] sm:$0xff]
        %v378 = vld [vmem:[%s252 + $0x260] sm:$0xff]
        %v379 = vld [vmem:[%s252 + $0x268] sm:$0xff]
        %v380 = vld [vmem:[%s252 + $0x270] sm:$0xff]
        %v381 = vld [vmem:[%s252 + $0x278] sm:$0xff]
        %v382 = vld [vmem:[%s252 + $0x280] sm:$0xff]
        %v383 = vld [vmem:[%s252 + $0x288] sm:$0xff]
        %v384 = vld [vmem:[%s252 + $0x290] sm:$0xff]
        %v385 = vld [vmem:[%s252 + $0x298] sm:$0xff]
        %v386 = vld [vmem:[%s252 + $0x2a0] sm:$0xff]
        %v387 = vld [vmem:[%s252 + $0x2a8] sm:$0xff]
        %v388 = vld [vmem:[%s252 + $0x2b0] sm:$0xff]
        %v389 = vld [vmem:[%s252 + $0x2b8] sm:$0xff]
        %v390 = vld [vmem:[%s252 + $0x2c0] sm:$0xff]
        %v391 = vld [vmem:[%s252 + $0x2c8] sm:$0xff]
        %v392 = vld [vmem:[%s252 + $0x2d0] sm:$0xff]
        %v393 = vld [vmem:[%s252 + $0x2d8] sm:$0xff]
        %v394 = vld [vmem:[%s252 + $0x2e0] sm:$0xff]
        %v395 = vld [vmem:[%s252 + $0x2e8] sm:$0xff]
        %v396 = vld [vmem:[%s252 + $0x2f0] sm:$0xff]
        %v397 = vld [vmem:[%s252 + $0x2f8] sm:$0xff]
        %v398 = vld [vmem:[%s252 + $0x300] sm:$0xff]
        %v399 = vld [vmem:[%s252 + $0x308] sm:$0xff]
        %v400 = vld [vmem:[%s252 + $0x310] sm:$0xff]
        %v401 = vld [vmem:[%s252 + $0x318] sm:$0xff]
        %v402 = vld [vmem:[%s252 + $0x320] sm:$0xff]
        %v403 = vld [vmem:[%s252 + $0x328] sm:$0xff]
        %v404 = vld [vmem:[%s252 + $0x330] sm:$0xff]
        %v405 = vld [vmem:[%s252 + $0x338] sm:$0xff]
        %v406 = vld [vmem:[%s252 + $0x340] sm:$0xff]
        %v407 = vld [vmem:[%s252 + $0x348] sm:$0xff]
        %v408 = vld [vmem:[%s252 + $0x350] sm:$0xff]
        %v409 = vld [vmem:[%s252 + $0x358] sm:$0xff]
        %v410 = vld [vmem:[%s252 + $0x360] sm:$0xff]
        %v411 = vld [vmem:[%s252 + $0x368] sm:$0xff]
        %v412 = vld [vmem:[%s252 + $0x370] sm:$0xff]
        %v413 = vld [vmem:[%s252 + $0x378] sm:$0xff]
        %v414 = vld [vmem:[%s252 + $0x380] sm:$0xff]
        %v415 = vld [vmem:[%s252 + $0x388] sm:$0xff]
        %v416 = vld [vmem:[%s252 + $0x390] sm:$0xff]
        %v417 = vld [vmem:[%s252 + $0x398] sm:$0xff]
        %v418 = vld [vmem:[%s252 + $0x3a0] sm:$0xff]
        %v419 = vld [vmem:[%s252 + $0x3a8] sm:$0xff]
        %v420 = vld [vmem:[%s252 + $0x3b0] sm:$0xff]
        %v421 = vld [vmem:[%s252 + $0x3b8] sm:$0xff]
        %v422 = vld [vmem:[%s252 + $0x3c0] sm:$0xff]
        %v423 = vld [vmem:[%s252 + $0x3c8] sm:$0xff]
        %v424 = vld [vmem:[%s252 + $0x3d0] sm:$0xff]
        %v425 = vld [vmem:[%s252 + $0x3d8] sm:$0xff]
        %v426 = vld [vmem:[%s252 + $0x3e0] sm:$0xff]
        %v427 = vld [vmem:[%s252 + $0x3e8] sm:$0xff]
        %v428 = vld [vmem:[%s252 + $0x3f0] sm:$0xff]
        %v429 = vld [vmem:[%s252 + $0x3f8] sm:$0xff]
        %v430 = vld [vmem:[%s252 + $0x400] sm:$0xff]
        %v431 = vld [vmem:[%s252 + $0x408] sm:$0xff]
        %v432 = vld [vmem:[%s252 + $0x410] sm:$0xff]
        %v433 = vld [vmem:[%s252 + $0x418] sm:$0xff]
        %v434 = vld [vmem:[%s252 + $0x420] sm:$0xff]
        %v435 = vld [vmem:[%s252 + $0x428] sm:$0xff]
        %v436 = vld [vmem:[%s252 + $0x430] sm:$0xff]
        %v437 = vld [vmem:[%s252 + $0x438] sm:$0xff]
        %v438 = vld [vmem:[%s252 + $0x440] sm:$0xff]
        %v439 = vld [vmem:[%s252 + $0x448] sm:$0xff]
        %v440 = vld [vmem:[%s252 + $0x450] sm:$0xff]
        %v441 = vld [vmem:[%s252 + $0x458] sm:$0xff]
        %v442 = vld [vmem:[%s252 + $0x460] sm:$0xff]
        %v443 = vld [vmem:[%s252 + $0x468] sm:$0xff]
        %v444 = vld [vmem:[%s252 + $0x470] sm:$0xff]
        %v445 = vld [vmem:[%s252 + $0x478] sm:$0xff]
        %v446 = vld [vmem:[%s252 + $0x480] sm:$0xff]
        %v447 = vld [vmem:[%s252 + $0x488] sm:$0xff]
        %v448 = vld [vmem:[%s252 + $0x490] sm:$0xff]
        %v449 = vld [vmem:[%s252 + $0x498] sm:$0xff]
        %v450 = vld [vmem:[%s252 + $0x4a0] sm:$0xff]
        %v451 = vld [vmem:[%s252 + $0x4a8] sm:$0xff]
        %v452 = vld [vmem:[%s252 + $0x4b0] sm:$0xff]
        %v453 = vld [vmem:[%s252 + $0x4b8] sm:$0xff]
        %v454 = vld [vmem:[%s252 + $0x4c0] sm:$0xff]
        %v455 = vld [vmem:[%s252 + $0x4c8] sm:$0xff]
        %v456 = vld [vmem:[%s252 + $0x4d0] sm:$0xff]
        %v457 = vld [vmem:[%s252 + $0x4d8] sm:$0xff]
        %v458 = vld [vmem:[%s252 + $0x4e0] sm:$0xff]
        %v459 = vld [vmem:[%s252 + $0x4e8] sm:$0xff]
        %v460 = vld [vmem:[%s252 + $0x4f0] sm:$0xff]
        %v461 = vld [vmem:[%s252 + $0x4f8] sm:$0xff]
        %v462 = vld [vmem:[%s252 + $0x500] sm:$0xff]
        %v463 = vld [vmem:[%s252 + $0x508] sm:$0xff]
        %v464 = vld [vmem:[%s252 + $0x510] sm:$0xff]
        %v465 = vld [vmem:[%s252 + $0x518] sm:$0xff]
        %v466 = vld [vmem:[%s252 + $0x520] sm:$0xff]
        %v467 = vld [vmem:[%s252 + $0x528] sm:$0xff]
        %v468 = vld [vmem:[%s252 + $0x530] sm:$0xff]
        %v469 = vld [vmem:[%s252 + $0x538] sm:$0xff]
        %v470 = vld [vmem:[%s252 + $0x540] sm:$0xff]
        %v471 = vld [vmem:[%s252 + $0x548] sm:$0xff]
        %v472 = vld [vmem:[%s252 + $0x550] sm:$0xff]
        %v473 = vld [vmem:[%s252 + $0x558] sm:$0xff]
        %v474 = vld [vmem:[%s252 + $0x560] sm:$0xff]
        %v475 = vld [vmem:[%s252 + $0x568] sm:$0xff]
        %v476 = vld [vmem:[%s252 + $0x570] sm:$0xff]
        %v477 = vld [vmem:[%s252 + $0x578] sm:$0xff]
        %v478 = vld [vmem:[%s252 + $0x580] sm:$0xff]
        %v479 = vld [vmem:[%s252 + $0x588] sm:$0xff]
        %v480 = vld [vmem:[%s252 + $0x590] sm:$0xff]
        %v481 = vld [vmem:[%s252 + $0x598] sm:$0xff]
        %v482 = vld [vmem:[%s252 + $0x5a0] sm:$0xff]
        %v483 = vld [vmem:[%s252 + $0x5a8] sm:$0xff]
        %v484 = vld [vmem:[%s252 + $0x5b0] sm:$0xff]
        %v485 = vld [vmem:[%s252 + $0x5b8] sm:$0xff]
        %v486 = vld [vmem:[%s252 + $0x5c0] sm:$0xff]
        %v487 = vld [vmem:[%s252 + $0x5c8] sm:$0xff]
        %v488 = vld [vmem:[%s252 + $0x5d0] sm:$0xff]
        %v489 = vld [vmem:[%s252 + $0x5d8] sm:$0xff]
        %v490 = vld [vmem:[%s252 + $0x5e0] sm:$0xff]
        %v491 = vld [vmem:[%s252 + $0x5e8] sm:$0xff]
        %v492 = vld [vmem:[%s252 + $0x5f0] sm:$0xff]
        %v493 = vld [vmem:[%s252 + $0x5f8] sm:$0xff]
        %v494 = vld [vmem:[%s252 + $0x600] sm:$0xff]
        %v495 = vld [vmem:[%s252 + $0x608] sm:$0xff]
        %v496 = vld [vmem:[%s252 + $0x610] sm:$0xff]
        %v497 = vld [vmem:[%s252 + $0x618] sm:$0xff]
        %v498 = vld [vmem:[%s252 + $0x620] sm:$0xff]
        %v499 = vld [vmem:[%s252 + $0x628] sm:$0xff]
        %v500 = vld [vmem:[%s252 + $0x630] sm:$0xff]
        %v501 = vld [vmem:[%s252 + $0x638] sm:$0xff]
        %v502 = vld [vmem:[%s252 + $0x640] sm:$0xff]
        %v503 = vld [vmem:[%s252 + $0x648] sm:$0xff]
        %v504 = vld [vmem:[%s252 + $0x650] sm:$0xff]
        %v505 = vld [vmem:[%s252 + $0x658] sm:$0xff]
        %v506 = vld [vmem:[%s252 + $0x660] sm:$0xff]
        %v507 = vld [vmem:[%s252 + $0x668] sm:$0xff]
        %v508 = vld [vmem:[%s252 + $0x670] sm:$0xff]
        %v509 = vld [vmem:[%s252 + $0x678] sm:$0xff]
        %v510 = vld [vmem:[%s252 + $0x680] sm:$0xff]
        %v511 = vld [vmem:[%s252 + $0x688] sm:$0xff]
        %v512 = vld [vmem:[%s252 + $0x690] sm:$0xff]
        %v513 = vld [vmem:[%s252 + $0x698] sm:$0xff]
        %v514 = vld [vmem:[%s252 + $0x6a0] sm:$0xff]
        %v515 = vld [vmem:[%s252 + $0x6a8] sm:$0xff]
        %v516 = vld [vmem:[%s252 + $0x6b0] sm:$0xff]
        %v517 = vld [vmem:[%s252 + $0x6b8] sm:$0xff]
        %v518 = vld [vmem:[%s252 + $0x6c0] sm:$0xff]
        %v519 = vld [vmem:[%s252 + $0x6c8] sm:$0xff]
        %v520 = vld [vmem:[%s252 + $0x6d0] sm:$0xff]
        %v521 = vld [vmem:[%s252 + $0x6d8] sm:$0xff]
        %v522 = vld [vmem:[%s252 + $0x6e0] sm:$0xff]
        %v523 = vld [vmem:[%s252 + $0x6e8] sm:$0xff]
        %v524 = vld [vmem:[%s252 + $0x6f0] sm:$0xff]
        %v525 = vld [vmem:[%s252 + $0x6f8] sm:$0xff]
        %v750 = vunpack.c.l.b16 %v302
        %v751 = vunpack.c.h.b16 %v302
        %v752 = vunpack.c.l.b16 %v303
        %v753 = vunpack.c.h.b16 %v303
        %v754 = vunpack.c.l.b16 %v304
        %v755 = vunpack.c.h.b16 %v304
        %v756 = vunpack.c.l.b16 %v305
        %v757 = vunpack.c.h.b16 %v305
        %v758 = vunpack.c.l.b16 %v306
        %v759 = vunpack.c.h.b16 %v306
        %v760 = vunpack.c.l.b16 %v307
        %v761 = vunpack.c.h.b16 %v307
        %v762 = vunpack.c.l.b16 %v308
        %v763 = vunpack.c.h.b16 %v308
        %v764 = vunpack.c.l.b16 %v309
        %v765 = vunpack.c.h.b16 %v309
        %v766 = vunpack.c.l.b16 %v310
        %v767 = vunpack.c.h.b16 %v310
        %v768 = vunpack.c.l.b16 %v311
        %v769 = vunpack.c.h.b16 %v311
        %v770 = vunpack.c.l.b16 %v312
        %v771 = vunpack.c.h.b16 %v312
        %v772 = vunpack.c.l.b16 %v313
        %v773 = vunpack.c.h.b16 %v313
        %v774 = vunpack.c.l.b16 %v314
        %v775 = vunpack.c.h.b16 %v314
        %v776 = vunpack.c.l.b16 %v315
        %v777 = vunpack.c.h.b16 %v315
        %v778 = vunpack.c.l.b16 %v316
        %v779 = vunpack.c.h.b16 %v316
        %v780 = vunpack.c.l.b16 %v317
        %v781 = vunpack.c.h.b16 %v317
        %v782 = vunpack.c.l.b16 %v318
        %v783 = vunpack.c.h.b16 %v318
        %v784 = vunpack.c.l.b16 %v319
        %v785 = vunpack.c.h.b16 %v319
        %v786 = vunpack.c.l.b16 %v320
        %v787 = vunpack.c.h.b16 %v320
        %v788 = vunpack.c.l.b16 %v321
        %v789 = vunpack.c.h.b16 %v321
        %v790 = vunpack.c.l.b16 %v322
        %v791 = vunpack.c.h.b16 %v322
        %v792 = vunpack.c.l.b16 %v323
        %v793 = vunpack.c.h.b16 %v323
        %v794 = vunpack.c.l.b16 %v324
        %v795 = vunpack.c.h.b16 %v324
        %v796 = vunpack.c.l.b16 %v325
        %v797 = vunpack.c.h.b16 %v325
        %v798 = vunpack.c.l.b16 %v326
        %v799 = vunpack.c.h.b16 %v326
        %v800 = vunpack.c.l.b16 %v327
        %v801 = vunpack.c.h.b16 %v327
        %v802 = vunpack.c.l.b16 %v328
        %v803 = vunpack.c.h.b16 %v328
        %v804 = vunpack.c.l.b16 %v329
        %v805 = vunpack.c.h.b16 %v329
        %v806 = vunpack.c.l.b16 %v330
        %v807 = vunpack.c.h.b16 %v330
        %v808 = vunpack.c.l.b16 %v331
        %v809 = vunpack.c.h.b16 %v331
        %v810 = vunpack.c.l.b16 %v332
        %v811 = vunpack.c.h.b16 %v332
        %v812 = vunpack.c.l.b16 %v333
        %v813 = vunpack.c.h.b16 %v333
        %v814 = vunpack.c.l.b16 %v334
        %v815 = vunpack.c.h.b16 %v334
        %v816 = vunpack.c.l.b16 %v335
        %v817 = vunpack.c.h.b16 %v335
        %v818 = vunpack.c.l.b16 %v336
        %v819 = vunpack.c.h.b16 %v336
        %v820 = vunpack.c.l.b16 %v337
        %v821 = vunpack.c.h.b16 %v337
        %v822 = vunpack.c.l.b16 %v338
        %v823 = vunpack.c.h.b16 %v338
        %v824 = vunpack.c.l.b16 %v339
        %v825 = vunpack.c.h.b16 %v339
        %v826 = vunpack.c.l.b16 %v340
        %v827 = vunpack.c.h.b16 %v340
        %v828 = vunpack.c.l.b16 %v341
        %v829 = vunpack.c.h.b16 %v341
        %v830 = vunpack.c.l.b16 %v342
        %v831 = vunpack.c.h.b16 %v342
        %v832 = vunpack.c.l.b16 %v343
        %v833 = vunpack.c.h.b16 %v343
        %v834 = vunpack.c.l.b16 %v344
        %v835 = vunpack.c.h.b16 %v344
        %v836 = vunpack.c.l.b16 %v345
        %v837 = vunpack.c.h.b16 %v345
        %v838 = vunpack.c.l.b16 %v346
        %v839 = vunpack.c.h.b16 %v346
        %v840 = vunpack.c.l.b16 %v347
        %v841 = vunpack.c.h.b16 %v347
        %v842 = vunpack.c.l.b16 %v348
        %v843 = vunpack.c.h.b16 %v348
        %v844 = vunpack.c.l.b16 %v349
        %v845 = vunpack.c.h.b16 %v349
        %v846 = vunpack.c.l.b16 %v350
        %v847 = vunpack.c.h.b16 %v350
        %v848 = vunpack.c.l.b16 %v351
        %v849 = vunpack.c.h.b16 %v351
        %v850 = vunpack.c.l.b16 %v352
        %v851 = vunpack.c.h.b16 %v352
        %v852 = vunpack.c.l.b16 %v353
        %v853 = vunpack.c.h.b16 %v353
        %v854 = vunpack.c.l.b16 %v354
        %v855 = vunpack.c.h.b16 %v354
        %v856 = vunpack.c.l.b16 %v355
        %v857 = vunpack.c.h.b16 %v355
        %v858 = vunpack.c.l.b16 %v356
        %v859 = vunpack.c.h.b16 %v356
        %v860 = vunpack.c.l.b16 %v357
        %v861 = vunpack.c.h.b16 %v357
        %v862 = vunpack.c.l.b16 %v358
        %v863 = vunpack.c.h.b16 %v358
        %v864 = vunpack.c.l.b16 %v359
        %v865 = vunpack.c.h.b16 %v359
        %v866 = vunpack.c.l.b16 %v360
        %v867 = vunpack.c.h.b16 %v360
        %v868 = vunpack.c.l.b16 %v361
        %v869 = vunpack.c.h.b16 %v361
        %v870 = vunpack.c.l.b16 %v362
        %v871 = vunpack.c.h.b16 %v362
        %v872 = vunpack.c.l.b16 %v363
        %v873 = vunpack.c.h.b16 %v363
        %v874 = vunpack.c.l.b16 %v364
        %v875 = vunpack.c.h.b16 %v364
        %v876 = vunpack.c.l.b16 %v365
        %v877 = vunpack.c.h.b16 %v365
        %v878 = vunpack.c.l.b16 %v366
        %v879 = vunpack.c.h.b16 %v366
        %v880 = vunpack.c.l.b16 %v367
        %v881 = vunpack.c.h.b16 %v367
        %v882 = vunpack.c.l.b16 %v368
        %v883 = vunpack.c.h.b16 %v368
        %v884 = vunpack.c.l.b16 %v369
        %v885 = vunpack.c.h.b16 %v369
        %v886 = vunpack.c.l.b16 %v370
        %v887 = vunpack.c.h.b16 %v370
        %v888 = vunpack.c.l.b16 %v371
        %v889 = vunpack.c.h.b16 %v371
        %v890 = vunpack.c.l.b16 %v372
        %v891 = vunpack.c.h.b16 %v372
        %v892 = vunpack.c.l.b16 %v373
        %v893 = vunpack.c.h.b16 %v373
        %v894 = vunpack.c.l.b16 %v374
        %v895 = vunpack.c.h.b16 %v374
        %v896 = vunpack.c.l.b16 %v375
        %v897 = vunpack.c.h.b16 %v375
        %v898 = vunpack.c.l.b16 %v376
        %v899 = vunpack.c.h.b16 %v376
        %v900 = vunpack.c.l.b16 %v377
        %v901 = vunpack.c.h.b16 %v377
        %v902 = vunpack.c.l.b16 %v378
        %v903 = vunpack.c.h.b16 %v378
        %v904 = vunpack.c.l.b16 %v379
        %v905 = vunpack.c.h.b16 %v379
        %v906 = vunpack.c.l.b16 %v380
        %v907 = vunpack.c.h.b16 %v380
        %v908 = vunpack.c.l.b16 %v381
        %v909 = vunpack.c.h.b16 %v381
        %v910 = vunpack.c.l.b16 %v382
        %v911 = vunpack.c.h.b16 %v382
        %v912 = vunpack.c.l.b16 %v383
        %v913 = vunpack.c.h.b16 %v383
        %v914 = vunpack.c.l.b16 %v384
        %v915 = vunpack.c.h.b16 %v384
        %v916 = vunpack.c.l.b16 %v385
        %v917 = vunpack.c.h.b16 %v385
        %v918 = vunpack.c.l.b16 %v386
        %v919 = vunpack.c.h.b16 %v386
        %v920 = vunpack.c.l.b16 %v387
        %v921 = vunpack.c.h.b16 %v387
        %v922 = vunpack.c.l.b16 %v388
        %v923 = vunpack.c.h.b16 %v388
        %v924 = vunpack.c.l.b16 %v389
        %v925 = vunpack.c.h.b16 %v389
        %v926 = vunpack.c.l.b16 %v390
        %v927 = vunpack.c.h.b16 %v390
        %v928 = vunpack.c.l.b16 %v391
        %v929 = vunpack.c.h.b16 %v391
        %v930 = vunpack.c.l.b16 %v392
        %v931 = vunpack.c.h.b16 %v392
        %v932 = vunpack.c.l.b16 %v393
        %v933 = vunpack.c.h.b16 %v393
        %v934 = vunpack.c.l.b16 %v394
        %v935 = vunpack.c.h.b16 %v394
        %v936 = vunpack.c.l.b16 %v395
        %v937 = vunpack.c.h.b16 %v395
        %v938 = vunpack.c.l.b16 %v396
        %v939 = vunpack.c.h.b16 %v396
        %v940 = vunpack.c.l.b16 %v397
        %v941 = vunpack.c.h.b16 %v397
        %v942 = vunpack.c.l.b16 %v398
        %v943 = vunpack.c.h.b16 %v398
        %v944 = vunpack.c.l.b16 %v399
        %v945 = vunpack.c.h.b16 %v399
        %v946 = vunpack.c.l.b16 %v400
        %v947 = vunpack.c.h.b16 %v400
        %v948 = vunpack.c.l.b16 %v401
        %v949 = vunpack.c.h.b16 %v401
        %v950 = vunpack.c.l.b16 %v402
        %v951 = vunpack.c.h.b16 %v402
        %v952 = vunpack.c.l.b16 %v403
        %v953 = vunpack.c.h.b16 %v403
        %v954 = vunpack.c.l.b16 %v404
        %v955 = vunpack.c.h.b16 %v404
        %v956 = vunpack.c.l.b16 %v405
        %v957 = vunpack.c.h.b16 %v405
        %v958 = vunpack.c.l.b16 %v406
        %v959 = vunpack.c.h.b16 %v406
        %v960 = vunpack.c.l.b16 %v407
        %v961 = vunpack.c.h.b16 %v407
        %v962 = vunpack.c.l.b16 %v408
        %v963 = vunpack.c.h.b16 %v408
        %v964 = vunpack.c.l.b16 %v409
        %v965 = vunpack.c.h.b16 %v409
        %v966 = vunpack.c.l.b16 %v410
        %v967 = vunpack.c.h.b16 %v410
        %v968 = vunpack.c.l.b16 %v411
        %v969 = vunpack.c.h.b16 %v411
        %v970 = vunpack.c.l.b16 %v412
        %v971 = vunpack.c.h.b16 %v412
        %v972 = vunpack.c.l.b16 %v413
        %v973 = vunpack.c.h.b16 %v413
        %v974 = vunpack.c.l.b16 %v414
        %v975 = vunpack.c.h.b16 %v414
        %v976 = vunpack.c.l.b16 %v415
        %v977 = vunpack.c.h.b16 %v415
        %v978 = vunpack.c.l.b16 %v416
        %v979 = vunpack.c.h.b16 %v416
        %v980 = vunpack.c.l.b16 %v417
        %v981 = vunpack.c.h.b16 %v417
        %v982 = vunpack.c.l.b16 %v418
        %v983 = vunpack.c.h.b16 %v418
        %v984 = vunpack.c.l.b16 %v419
        %v985 = vunpack.c.h.b16 %v419
        %v986 = vunpack.c.l.b16 %v420
        %v987 = vunpack.c.h.b16 %v420
        %v988 = vunpack.c.l.b16 %v421
        %v989 = vunpack.c.h.b16 %v421
        %v990 = vunpack.c.l.b16 %v422
        %v991 = vunpack.c.h.b16 %v422
        %v992 = vunpack.c.l.b16 %v423
        %v993 = vunpack.c.h.b16 %v423
        %v994 = vunpack.c.l.b16 %v424
        %v995 = vunpack.c.h.b16 %v424
        %v996 = vunpack.c.l.b16 %v425
        %v997 = vunpack.c.h.b16 %v425
        %v998 = vunpack.c.l.b16 %v426
        %v999 = vunpack.c.h.b16 %v426
        %v1000 = vunpack.c.l.b16 %v427
        %v1001 = vunpack.c.h.b16 %v427
        %v1002 = vunpack.c.l.b16 %v428
        %v1003 = vunpack.c.h.b16 %v428
        %v1004 = vunpack.c.l.b16 %v429
        %v1005 = vunpack.c.h.b16 %v429
        %v1006 = vunpack.c.l.b16 %v430
        %v1007 = vunpack.c.h.b16 %v430
        %v1008 = vunpack.c.l.b16 %v431
        %v1009 = vunpack.c.h.b16 %v431
        %v1010 = vunpack.c.l.b16 %v432
        %v1011 = vunpack.c.h.b16 %v432
        %v1012 = vunpack.c.l.b16 %v433
        %v1013 = vunpack.c.h.b16 %v433
        %v1014 = vunpack.c.l.b16 %v434
        %v1015 = vunpack.c.h.b16 %v434
        %v1016 = vunpack.c.l.b16 %v435
        %v1017 = vunpack.c.h.b16 %v435
        %v1018 = vunpack.c.l.b16 %v436
        %v1019 = vunpack.c.h.b16 %v436
        %v1020 = vunpack.c.l.b16 %v437
        %v1021 = vunpack.c.h.b16 %v437
        %v1022 = vunpack.c.l.b16 %v438
        %v1023 = vunpack.c.h.b16 %v438
        %v1024 = vunpack.c.l.b16 %v439
        %v1025 = vunpack.c.h.b16 %v439
        %v1026 = vunpack.c.l.b16 %v440
        %v1027 = vunpack.c.h.b16 %v440
        %v1028 = vunpack.c.l.b16 %v441
        %v1029 = vunpack.c.h.b16 %v441
        %v1030 = vunpack.c.l.b16 %v442
        %v1031 = vunpack.c.h.b16 %v442
        %v1032 = vunpack.c.l.b16 %v443
        %v1033 = vunpack.c.h.b16 %v443
        %v1034 = vunpack.c.l.b16 %v444
        %v1035 = vunpack.c.h.b16 %v444
        %v1036 = vunpack.c.l.b16 %v445
        %v1037 = vunpack.c.h.b16 %v445
        %v1038 = vunpack.c.l.b16 %v446
        %v1039 = vunpack.c.h.b16 %v446
        %v1040 = vunpack.c.l.b16 %v447
        %v1041 = vunpack.c.h.b16 %v447
        %v1042 = vunpack.c.l.b16 %v448
        %v1043 = vunpack.c.h.b16 %v448
        %v1044 = vunpack.c.l.b16 %v449
        %v1045 = vunpack.c.h.b16 %v449
        %v1046 = vunpack.c.l.b16 %v450
        %v1047 = vunpack.c.h.b16 %v450
        %v1048 = vunpack.c.l.b16 %v451
        %v1049 = vunpack.c.h.b16 %v451
        %v1050 = vunpack.c.l.b16 %v452
        %v1051 = vunpack.c.h.b16 %v452
        %v1052 = vunpack.c.l.b16 %v453
        %v1053 = vunpack.c.h.b16 %v453
        %v1054 = vunpack.c.l.b16 %v454
        %v1055 = vunpack.c.h.b16 %v454
        %v1056 = vunpack.c.l.b16 %v455
        %v1057 = vunpack.c.h.b16 %v455
        %v1058 = vunpack.c.l.b16 %v456
        %v1059 = vunpack.c.h.b16 %v456
        %v1060 = vunpack.c.l.b16 %v457
        %v1061 = vunpack.c.h.b16 %v457
        %v1062 = vunpack.c.l.b16 %v458
        %v1063 = vunpack.c.h.b16 %v458
        %v1064 = vunpack.c.l.b16 %v459
        %v1065 = vunpack.c.h.b16 %v459
        %v1066 = vunpack.c.l.b16 %v460
        %v1067 = vunpack.c.h.b16 %v460
        %v1068 = vunpack.c.l.b16 %v461
        %v1069 = vunpack.c.h.b16 %v461
        %v1070 = vunpack.c.l.b16 %v462
        %v1071 = vunpack.c.h.b16 %v462
        %v1072 = vunpack.c.l.b16 %v463
        %v1073 = vunpack.c.h.b16 %v463
        %v1074 = vunpack.c.l.b16 %v464
        %v1075 = vunpack.c.h.b16 %v464
        %v1076 = vunpack.c.l.b16 %v465
        %v1077 = vunpack.c.h.b16 %v465
        %v1078 = vunpack.c.l.b16 %v466
        %v1079 = vunpack.c.h.b16 %v466
        %v1080 = vunpack.c.l.b16 %v467
        %v1081 = vunpack.c.h.b16 %v467
        %v1082 = vunpack.c.l.b16 %v468
        %v1083 = vunpack.c.h.b16 %v468
        %v1084 = vunpack.c.l.b16 %v469
        %v1085 = vunpack.c.h.b16 %v469
        %v1086 = vunpack.c.l.b16 %v470
        %v1087 = vunpack.c.h.b16 %v470
        %v1088 = vunpack.c.l.b16 %v471
        %v1089 = vunpack.c.h.b16 %v471
        %v1090 = vunpack.c.l.b16 %v472
        %v1091 = vunpack.c.h.b16 %v472
        %v1092 = vunpack.c.l.b16 %v473
        %v1093 = vunpack.c.h.b16 %v473
        %v1094 = vunpack.c.l.b16 %v474
        %v1095 = vunpack.c.h.b16 %v474
        %v1096 = vunpack.c.l.b16 %v475
        %v1097 = vunpack.c.h.b16 %v475
        %v1098 = vunpack.c.l.b16 %v476
        %v1099 = vunpack.c.h.b16 %v476
        %v1100 = vunpack.c.l.b16 %v477
        %v1101 = vunpack.c.h.b16 %v477
        %v1102 = vunpack.c.l.b16 %v478
        %v1103 = vunpack.c.h.b16 %v478
        %v1104 = vunpack.c.l.b16 %v479
        %v1105 = vunpack.c.h.b16 %v479
        %v1106 = vunpack.c.l.b16 %v480
        %v1107 = vunpack.c.h.b16 %v480
        %v1108 = vunpack.c.l.b16 %v481
        %v1109 = vunpack.c.h.b16 %v481
        %v1110 = vunpack.c.l.b16 %v482
        %v1111 = vunpack.c.h.b16 %v482
        %v1112 = vunpack.c.l.b16 %v483
        %v1113 = vunpack.c.h.b16 %v483
        %v1114 = vunpack.c.l.b16 %v484
        %v1115 = vunpack.c.h.b16 %v484
        %v1116 = vunpack.c.l.b16 %v485
        %v1117 = vunpack.c.h.b16 %v485
        %v1118 = vunpack.c.l.b16 %v486
        %v1119 = vunpack.c.h.b16 %v486
        %v1120 = vunpack.c.l.b16 %v487
        %v1121 = vunpack.c.h.b16 %v487
        %v1122 = vunpack.c.l.b16 %v488
        %v1123 = vunpack.c.h.b16 %v488
        %v1124 = vunpack.c.l.b16 %v489
        %v1125 = vunpack.c.h.b16 %v489
        %v1126 = vunpack.c.l.b16 %v490
        %v1127 = vunpack.c.h.b16 %v490
        %v1128 = vunpack.c.l.b16 %v491
        %v1129 = vunpack.c.h.b16 %v491
        %v1130 = vunpack.c.l.b16 %v492
        %v1131 = vunpack.c.h.b16 %v492
        %v1132 = vunpack.c.l.b16 %v493
        %v1133 = vunpack.c.h.b16 %v493
        %v1134 = vunpack.c.l.b16 %v494
        %v1135 = vunpack.c.h.b16 %v494
        %v1136 = vunpack.c.l.b16 %v495
        %v1137 = vunpack.c.h.b16 %v495
        %v1138 = vunpack.c.l.b16 %v496
        %v1139 = vunpack.c.h.b16 %v496
        %v1140 = vunpack.c.l.b16 %v497
        %v1141 = vunpack.c.h.b16 %v497
        %v1142 = vunpack.c.l.b16 %v498
        %v1143 = vunpack.c.h.b16 %v498
        %v1144 = vunpack.c.l.b16 %v499
        %v1145 = vunpack.c.h.b16 %v499
        %v1146 = vunpack.c.l.b16 %v500
        %v1147 = vunpack.c.h.b16 %v500
        %v1148 = vunpack.c.l.b16 %v501
        %v1149 = vunpack.c.h.b16 %v501
        %v1150 = vunpack.c.l.b16 %v502
        %v1151 = vunpack.c.h.b16 %v502
        %v1152 = vunpack.c.l.b16 %v503
        %v1153 = vunpack.c.h.b16 %v503
        %v1154 = vunpack.c.l.b16 %v504
        %v1155 = vunpack.c.h.b16 %v504
        %v1156 = vunpack.c.l.b16 %v505
        %v1157 = vunpack.c.h.b16 %v505
        %v1158 = vunpack.c.l.b16 %v506
        %v1159 = vunpack.c.h.b16 %v506
        %v1160 = vunpack.c.l.b16 %v507
        %v1161 = vunpack.c.h.b16 %v507
        %v1162 = vunpack.c.l.b16 %v508
        %v1163 = vunpack.c.h.b16 %v508
        %v1164 = vunpack.c.l.b16 %v509
        %v1165 = vunpack.c.h.b16 %v509
        %v1166 = vunpack.c.l.b16 %v510
        %v1167 = vunpack.c.h.b16 %v510
        %v1168 = vunpack.c.l.b16 %v511
        %v1169 = vunpack.c.h.b16 %v511
        %v1170 = vunpack.c.l.b16 %v512
        %v1171 = vunpack.c.h.b16 %v512
        %v1172 = vunpack.c.l.b16 %v513
        %v1173 = vunpack.c.h.b16 %v513
        %v1174 = vunpack.c.l.b16 %v514
        %v1175 = vunpack.c.h.b16 %v514
        %v1176 = vunpack.c.l.b16 %v515
        %v1177 = vunpack.c.h.b16 %v515
        %v1178 = vunpack.c.l.b16 %v516
        %v1179 = vunpack.c.h.b16 %v516
        %v1180 = vunpack.c.l.b16 %v517
        %v1181 = vunpack.c.h.b16 %v517
        %v1182 = vunpack.c.l.b16 %v518
        %v1183 = vunpack.c.h.b16 %v518
        %v1184 = vunpack.c.l.b16 %v519
        %v1185 = vunpack.c.h.b16 %v519
        %v1186 = vunpack.c.l.b16 %v520
        %v1187 = vunpack.c.h.b16 %v520
        %v1188 = vunpack.c.l.b16 %v521
        %v1189 = vunpack.c.h.b16 %v521
        %v1190 = vunpack.c.l.b16 %v522
        %v1191 = vunpack.c.h.b16 %v522
        %v1192 = vunpack.c.l.b16 %v523
        %v1193 = vunpack.c.h.b16 %v523
        %v1194 = vunpack.c.l.b16 %v524
        %v1195 = vunpack.c.h.b16 %v524
        %v1196 = vunpack.c.l.b16 %v525
        %v1197 = vunpack.c.h.b16 %v525
        %v1198 = vpack.c.b16 %v764, %v750
        %v1199 = vpack.c.b16 %v765, %v751
        %v1200 = vpack.c.b16 %v766, %v752
        %v1201 = vpack.c.b16 %v767, %v753
        %v1202 = vpack.c.b16 %v768, %v754
        %v1203 = vpack.c.b16 %v769, %v755
        %v1204 = vpack.c.b16 %v770, %v756
        %v1205 = vpack.c.b16 %v771, %v757
        %v1206 = vpack.c.b16 %v772, %v758
        %v1207 = vpack.c.b16 %v773, %v759
        %v1208 = vpack.c.b16 %v774, %v760
        %v1209 = vpack.c.b16 %v775, %v761
        %v1210 = vpack.c.b16 %v776, %v762
        %v1211 = vpack.c.b16 %v777, %v763
        %v1212 = vpack.c.b16 %v792, %v778
        %v1213 = vpack.c.b16 %v793, %v779
        %v1214 = vpack.c.b16 %v794, %v780
        %v1215 = vpack.c.b16 %v795, %v781
        %v1216 = vpack.c.b16 %v796, %v782
        %v1217 = vpack.c.b16 %v797, %v783
        %v1218 = vpack.c.b16 %v798, %v784
        %v1219 = vpack.c.b16 %v799, %v785
        %v1220 = vpack.c.b16 %v800, %v786
        %v1221 = vpack.c.b16 %v801, %v787
        %v1222 = vpack.c.b16 %v802, %v788
        %v1223 = vpack.c.b16 %v803, %v789
        %v1224 = vpack.c.b16 %v804, %v790
        %v1225 = vpack.c.b16 %v805, %v791
        %v1226 = vpack.c.b16 %v820, %v806
        %v1227 = vpack.c.b16 %v821, %v807
        %v1228 = vpack.c.b16 %v822, %v808
        %v1229 = vpack.c.b16 %v823, %v809
        %v1230 = vpack.c.b16 %v824, %v810
        %v1231 = vpack.c.b16 %v825, %v811
        %v1232 = vpack.c.b16 %v826, %v812
        %v1233 = vpack.c.b16 %v827, %v813
        %v1234 = vpack.c.b16 %v828, %v814
        %v1235 = vpack.c.b16 %v829, %v815
        %v1236 = vpack.c.b16 %v830, %v816
        %v1237 = vpack.c.b16 %v831, %v817
        %v1238 = vpack.c.b16 %v832, %v818
        %v1239 = vpack.c.b16 %v833, %v819
        %v1240 = vpack.c.b16 %v848, %v834
        %v1241 = vpack.c.b16 %v849, %v835
        %v1242 = vpack.c.b16 %v850, %v836
        %v1243 = vpack.c.b16 %v851, %v837
        %v1244 = vpack.c.b16 %v852, %v838
        %v1245 = vpack.c.b16 %v853, %v839
        %v1246 = vpack.c.b16 %v854, %v840
        %v1247 = vpack.c.b16 %v855, %v841
        %v1248 = vpack.c.b16 %v856, %v842
        %v1249 = vpack.c.b16 %v857, %v843
        %v1250 = vpack.c.b16 %v858, %v844
        %v1251 = vpack.c.b16 %v859, %v845
        %v1252 = vpack.c.b16 %v860, %v846
        %v1253 = vpack.c.b16 %v861, %v847
        %v1254 = vpack.c.b16 %v876, %v862
        %v1255 = vpack.c.b16 %v877, %v863
        %v1256 = vpack.c.b16 %v878, %v864
        %v1257 = vpack.c.b16 %v879, %v865
        %v1258 = vpack.c.b16 %v880, %v866
        %v1259 = vpack.c.b16 %v881, %v867
        %v1260 = vpack.c.b16 %v882, %v868
        %v1261 = vpack.c.b16 %v883, %v869
        %v1262 = vpack.c.b16 %v884, %v870
        %v1263 = vpack.c.b16 %v885, %v871
        %v1264 = vpack.c.b16 %v886, %v872
        %v1265 = vpack.c.b16 %v887, %v873
        %v1266 = vpack.c.b16 %v888, %v874
        %v1267 = vpack.c.b16 %v889, %v875
        %v1268 = vpack.c.b16 %v904, %v890
        %v1269 = vpack.c.b16 %v905, %v891
        %v1270 = vpack.c.b16 %v906, %v892
        %v1271 = vpack.c.b16 %v907, %v893
        %v1272 = vpack.c.b16 %v908, %v894
        %v1273 = vpack.c.b16 %v909, %v895
        %v1274 = vpack.c.b16 %v910, %v896
        %v1275 = vpack.c.b16 %v911, %v897
        %v1276 = vpack.c.b16 %v912, %v898
        %v1277 = vpack.c.b16 %v913, %v899
        %v1278 = vpack.c.b16 %v914, %v900
        %v1279 = vpack.c.b16 %v915, %v901
        %v1280 = vpack.c.b16 %v916, %v902
        %v1281 = vpack.c.b16 %v917, %v903
        %v1282 = vpack.c.b16 %v932, %v918
        %v1283 = vpack.c.b16 %v933, %v919
        %v1284 = vpack.c.b16 %v934, %v920
        %v1285 = vpack.c.b16 %v935, %v921
        %v1286 = vpack.c.b16 %v936, %v922
        %v1287 = vpack.c.b16 %v937, %v923
        %v1288 = vpack.c.b16 %v938, %v924
        %v1289 = vpack.c.b16 %v939, %v925
        %v1290 = vpack.c.b16 %v940, %v926
        %v1291 = vpack.c.b16 %v941, %v927
        %v1292 = vpack.c.b16 %v942, %v928
        %v1293 = vpack.c.b16 %v943, %v929
        %v1294 = vpack.c.b16 %v944, %v930
        %v1295 = vpack.c.b16 %v945, %v931
        %v1296 = vpack.c.b16 %v960, %v946
        %v1297 = vpack.c.b16 %v961, %v947
        %v1298 = vpack.c.b16 %v962, %v948
        %v1299 = vpack.c.b16 %v963, %v949
        %v1300 = vpack.c.b16 %v964, %v950
        %v1301 = vpack.c.b16 %v965, %v951
        %v1302 = vpack.c.b16 %v966, %v952
        %v1303 = vpack.c.b16 %v967, %v953
        %v1304 = vpack.c.b16 %v968, %v954
        %v1305 = vpack.c.b16 %v969, %v955
        %v1306 = vpack.c.b16 %v970, %v956
        %v1307 = vpack.c.b16 %v971, %v957
        %v1308 = vpack.c.b16 %v972, %v958
        %v1309 = vpack.c.b16 %v973, %v959
        %v1310 = vpack.c.b16 %v988, %v974
        %v1311 = vpack.c.b16 %v989, %v975
        %v1312 = vpack.c.b16 %v990, %v976
        %v1313 = vpack.c.b16 %v991, %v977
        %v1314 = vpack.c.b16 %v992, %v978
        %v1315 = vpack.c.b16 %v993, %v979
        %v1316 = vpack.c.b16 %v994, %v980
        %v1317 = vpack.c.b16 %v995, %v981
        %v1318 = vpack.c.b16 %v996, %v982
        %v1319 = vpack.c.b16 %v997, %v983
        %v1320 = vpack.c.b16 %v998, %v984
        %v1321 = vpack.c.b16 %v999, %v985
        %v1322 = vpack.c.b16 %v1000, %v986
        %v1323 = vpack.c.b16 %v1001, %v987
        %v1324 = vpack.c.b16 %v1016, %v1002
        %v1325 = vpack.c.b16 %v1017, %v1003
        %v1326 = vpack.c.b16 %v1018, %v1004
        %v1327 = vpack.c.b16 %v1019, %v1005
        %v1328 = vpack.c.b16 %v1020, %v1006
        %v1329 = vpack.c.b16 %v1021, %v1007
        %v1330 = vpack.c.b16 %v1022, %v1008
        %v1331 = vpack.c.b16 %v1023, %v1009
        %v1332 = vpack.c.b16 %v1024, %v1010
        %v1333 = vpack.c.b16 %v1025, %v1011
        %v1334 = vpack.c.b16 %v1026, %v1012
        %v1335 = vpack.c.b16 %v1027, %v1013
        %v1336 = vpack.c.b16 %v1028, %v1014
        %v1337 = vpack.c.b16 %v1029, %v1015
        %v1338 = vpack.c.b16 %v1044, %v1030
        %v1339 = vpack.c.b16 %v1045, %v1031
        %v1340 = vpack.c.b16 %v1046, %v1032
        %v1341 = vpack.c.b16 %v1047, %v1033
        %v1342 = vpack.c.b16 %v1048, %v1034
        %v1343 = vpack.c.b16 %v1049, %v1035
        %v1344 = vpack.c.b16 %v1050, %v1036
        %v1345 = vpack.c.b16 %v1051, %v1037
        %v1346 = vpack.c.b16 %v1052, %v1038
        %v1347 = vpack.c.b16 %v1053, %v1039
        %v1348 = vpack.c.b16 %v1054, %v1040
        %v1349 = vpack.c.b16 %v1055, %v1041
        %v1350 = vpack.c.b16 %v1056, %v1042
        %v1351 = vpack.c.b16 %v1057, %v1043
        %v1352 = vpack.c.b16 %v1072, %v1058
        %v1353 = vpack.c.b16 %v1073, %v1059
        %v1354 = vpack.c.b16 %v1074, %v1060
        %v1355 = vpack.c.b16 %v1075, %v1061
        %v1356 = vpack.c.b16 %v1076, %v1062
        %v1357 = vpack.c.b16 %v1077, %v1063
        %v1358 = vpack.c.b16 %v1078, %v1064
        %v1359 = vpack.c.b16 %v1079, %v1065
        %v1360 = vpack.c.b16 %v1080, %v1066
        %v1361 = vpack.c.b16 %v1081, %v1067
        %v1362 = vpack.c.b16 %v1082, %v1068
        %v1363 = vpack.c.b16 %v1083, %v1069
        %v1364 = vpack.c.b16 %v1084, %v1070
        %v1365 = vpack.c.b16 %v1085, %v1071
        %v1366 = vpack.c.b16 %v1100, %v1086
        %v1367 = vpack.c.b16 %v1101, %v1087
        %v1368 = vpack.c.b16 %v1102, %v1088
        %v1369 = vpack.c.b16 %v1103, %v1089
        %v1370 = vpack.c.b16 %v1104, %v1090
        %v1371 = vpack.c.b16 %v1105, %v1091
        %v1372 = vpack.c.b16 %v1106, %v1092
        %v1373 = vpack.c.b16 %v1107, %v1093
        %v1374 = vpack.c.b16 %v1108, %v1094
        %v1375 = vpack.c.b16 %v1109, %v1095
        %v1376 = vpack.c.b16 %v1110, %v1096
        %v1377 = vpack.c.b16 %v1111, %v1097
        %v1378 = vpack.c.b16 %v1112, %v1098
        %v1379 = vpack.c.b16 %v1113, %v1099
        %v1380 = vpack.c.b16 %v1128, %v1114
        %v1381 = vpack.c.b16 %v1129, %v1115
        %v1382 = vpack.c.b16 %v1130, %v1116
        %v1383 = vpack.c.b16 %v1131, %v1117
        %v1384 = vpack.c.b16 %v1132, %v1118
        %v1385 = vpack.c.b16 %v1133, %v1119
        %v1386 = vpack.c.b16 %v1134, %v1120
        %v1387 = vpack.c.b16 %v1135, %v1121
        %v1388 = vpack.c.b16 %v1136, %v1122
        %v1389 = vpack.c.b16 %v1137, %v1123
        %v1390 = vpack.c.b16 %v1138, %v1124
        %v1391 = vpack.c.b16 %v1139, %v1125
        %v1392 = vpack.c.b16 %v1140, %v1126
        %v1393 = vpack.c.b16 %v1141, %v1127
        %v1394 = vpack.c.b16 %v1156, %v1142
        %v1395 = vpack.c.b16 %v1157, %v1143
        %v1396 = vpack.c.b16 %v1158, %v1144
        %v1397 = vpack.c.b16 %v1159, %v1145
        %v1398 = vpack.c.b16 %v1160, %v1146
        %v1399 = vpack.c.b16 %v1161, %v1147
        %v1400 = vpack.c.b16 %v1162, %v1148
        %v1401 = vpack.c.b16 %v1163, %v1149
        %v1402 = vpack.c.b16 %v1164, %v1150
        %v1403 = vpack.c.b16 %v1165, %v1151
        %v1404 = vpack.c.b16 %v1166, %v1152
        %v1405 = vpack.c.b16 %v1167, %v1153
        %v1406 = vpack.c.b16 %v1168, %v1154
        %v1407 = vpack.c.b16 %v1169, %v1155
        %v1408 = vpack.c.b16 %v1184, %v1170
        %v1409 = vpack.c.b16 %v1185, %v1171
        %v1410 = vpack.c.b16 %v1186, %v1172
        %v1411 = vpack.c.b16 %v1187, %v1173
        %v1412 = vpack.c.b16 %v1188, %v1174
        %v1413 = vpack.c.b16 %v1189, %v1175
        %v1414 = vpack.c.b16 %v1190, %v1176
        %v1415 = vpack.c.b16 %v1191, %v1177
        %v1416 = vpack.c.b16 %v1192, %v1178
        %v1417 = vpack.c.b16 %v1193, %v1179
        %v1418 = vpack.c.b16 %v1194, %v1180
        %v1419 = vpack.c.b16 %v1195, %v1181
        %v1420 = vpack.c.b16 %v1196, %v1182
        %v1421 = vpack.c.b16 %v1197, %v1183
        %1646 = vmatprep.subr.bf16.mxu0 %v1199
        %1647 = vmatpush1.bf16.msra.mxu0 %v1198
        %1648 = vmatprep.subr.bf16.mxu0 %v1213
        %1649 = vmatpush1.bf16.msra.mxu0 %v1212
        %1650 = vmatprep.subr.bf16.mxu0 %v1227
        %1651 = vmatpush1.bf16.msra.mxu0 %v1226
        %1652 = vmatprep.subr.bf16.mxu0 %v1241
        %1653 = vmatpush1.bf16.msra.mxu0 %v1240
        %1654 = vmatprep.subr.bf16.mxu0 %v1255
        %1655 = vmatpush1.bf16.msra.mxu0 %v1254
        %1656 = vmatprep.subr.bf16.mxu0 %v1269
        %1657 = vmatpush1.bf16.msra.mxu0 %v1268
        %1658 = vmatprep.subr.bf16.mxu0 %v1283
        %1659 = vmatpush1.bf16.msra.mxu0 %v1282
        %1660 = vmatprep.subr.bf16.mxu0 %v1297
        %1661 = vmatpush1.bf16.msra.mxu0 %v1296
        %1662 = vmatprep.subr.bf16.mxu0 %v1311
        %1663 = vmatpush1.bf16.msra.mxu0 %v1310
        %1664 = vmatprep.subr.bf16.mxu0 %v1325
        %1665 = vmatpush1.bf16.msra.mxu0 %v1324
        %1666 = vmatprep.subr.bf16.mxu0 %v1339
        %1667 = vmatpush1.bf16.msra.mxu0 %v1338
        %1668 = vmatprep.subr.bf16.mxu0 %v1353
        %1669 = vmatpush1.bf16.msra.mxu0 %v1352
        %1670 = vmatprep.subr.bf16.mxu0 %v1367
        %1671 = vmatpush1.bf16.msra.mxu0 %v1366
        %1672 = vmatprep.subr.bf16.mxu0 %v1381
        %1673 = vmatpush1.bf16.msra.mxu0 %v1380
        %1674 = vmatprep.subr.bf16.mxu0 %v1395
        %1675 = vmatpush1.bf16.msra.mxu0 %v1394
        %1676 = vmatprep.subr.bf16.mxu0 %v1409
        %1677 = vmatpush1.bf16.msra.mxu0 %v1408
        %1678 = vmatprep.mubr.bf16.mxu0 %v301
        %1679 = vmatmul.mubr.bf16.gmra.mrb[0].mxu0 %v300
        %v1680 = vpop.f32.mrb[0].mxu0
        %v1681 = vadd.f32 0.0, %v1680
        %v1682 = vpop.f32.mrb[0].mxu0
        %v1683 = vadd.f32 0.0, %v1682
        %v1684 = vpop.f32.mrb[0].mxu0
        %v1685 = vadd.f32 0.0, %v1684
        %v1686 = vpop.f32.mrb[0].mxu0
        %v1687 = vadd.f32 0.0, %v1686
        %1688 = vdwg.mxu0
        %1689 = vmatprep.subr.bf16.mxu0 %v1201
        %1690 = vmatpush1.bf16.msra.mxu0 %v1200
        %1691 = vmatprep.subr.bf16.mxu0 %v1215
        %1692 = vmatpush1.bf16.msra.mxu0 %v1214
        %1693 = vmatprep.subr.bf16.mxu0 %v1229
        %1694 = vmatpush1.bf16.msra.mxu0 %v1228
        %1695 = vmatprep.subr.bf16.mxu0 %v1243
        %1696 = vmatpush1.bf16.msra.mxu0 %v1242
        %1697 = vmatprep.subr.bf16.mxu0 %v1257
        %1698 = vmatpush1.bf16.msra.mxu0 %v1256
        %1699 = vmatprep.subr.bf16.mxu0 %v1271
        %1700 = vmatpush1.bf16.msra.mxu0 %v1270
        %1701 = vmatprep.subr.bf16.mxu0 %v1285
        %1702 = vmatpush1.bf16.msra.mxu0 %v1284
        %1703 = vmatprep.subr.bf16.mxu0 %v1299
        %1704 = vmatpush1.bf16.msra.mxu0 %v1298
        %1705 = vmatprep.subr.bf16.mxu0 %v1313
        %1706 = vmatpush1.bf16.msra.mxu0 %v1312
        %1707 = vmatprep.subr.bf16.mxu0 %v1327
        %1708 = vmatpush1.bf16.msra.mxu0 %v1326
        %1709 = vmatprep.subr.bf16.mxu0 %v1341
        %1710 = vmatpush1.bf16.msra.mxu0 %v1340
        %1711 = vmatprep.subr.bf16.mxu0 %v1355
        %1712 = vmatpush1.bf16.msra.mxu0 %v1354
        %1713 = vmatprep.subr.bf16.mxu0 %v1369
        %1714 = vmatpush1.bf16.msra.mxu0 %v1368
        %1715 = vmatprep.subr.bf16.mxu0 %v1383
        %1716 = vmatpush1.bf16.msra.mxu0 %v1382
        %1717 = vmatprep.subr.bf16.mxu0 %v1397
        %1718 = vmatpush1.bf16.msra.mxu0 %v1396
        %1719 = vmatprep.subr.bf16.mxu0 %v1411
        %1720 = vmatpush1.bf16.msra.mxu0 %v1410
        %1721 = vmatprep.mubr.bf16.mxu0 %v301
        %1722 = vmatmul.mubr.bf16.gmra.mrb[0].mxu0 %v300
        %v1723 = vpop.f32.mrb[0].mxu0
        %v1724 = vadd.f32 0.0, %v1723
        %v1725 = vpop.f32.mrb[0].mxu0
        %v1726 = vadd.f32 0.0, %v1725
        %v1727 = vpop.f32.mrb[0].mxu0
        %v1728 = vadd.f32 0.0, %v1727
        %v1729 = vpop.f32.mrb[0].mxu0
        %v1730 = vadd.f32 0.0, %v1729
        %1731 = vdwg.mxu0
        %1732 = vmatprep.subr.bf16.mxu0 %v1203
        %1733 = vmatpush1.bf16.msra.mxu0 %v1202
        %1734 = vmatprep.subr.bf16.mxu0 %v1217
        %1735 = vmatpush1.bf16.msra.mxu0 %v1216
        %1736 = vmatprep.subr.bf16.mxu0 %v1231
        %1737 = vmatpush1.bf16.msra.mxu0 %v1230
        %1738 = vmatprep.subr.bf16.mxu0 %v1245
        %1739 = vmatpush1.bf16.msra.mxu0 %v1244
        %1740 = vmatprep.subr.bf16.mxu0 %v1259
        %1741 = vmatpush1.bf16.msra.mxu0 %v1258
        %1742 = vmatprep.subr.bf16.mxu0 %v1273
        %1743 = vmatpush1.bf16.msra.mxu0 %v1272
        %1744 = vmatprep.subr.bf16.mxu0 %v1287
        %1745 = vmatpush1.bf16.msra.mxu0 %v1286
        %1746 = vmatprep.subr.bf16.mxu0 %v1301
        %1747 = vmatpush1.bf16.msra.mxu0 %v1300
        %1748 = vmatprep.subr.bf16.mxu0 %v1315
        %1749 = vmatpush1.bf16.msra.mxu0 %v1314
        %1750 = vmatprep.subr.bf16.mxu0 %v1329
        %1751 = vmatpush1.bf16.msra.mxu0 %v1328
        %1752 = vmatprep.subr.bf16.mxu0 %v1343
        %1753 = vmatpush1.bf16.msra.mxu0 %v1342
        %1754 = vmatprep.subr.bf16.mxu0 %v1357
        %1755 = vmatpush1.bf16.msra.mxu0 %v1356
        %1756 = vmatprep.subr.bf16.mxu0 %v1371
        %1757 = vmatpush1.bf16.msra.mxu0 %v1370
        %1758 = vmatprep.subr.bf16.mxu0 %v1385
        %1759 = vmatpush1.bf16.msra.mxu0 %v1384
        %1760 = vmatprep.subr.bf16.mxu0 %v1399
        %1761 = vmatpush1.bf16.msra.mxu0 %v1398
        %1762 = vmatprep.subr.bf16.mxu0 %v1413
        %1763 = vmatpush1.bf16.msra.mxu0 %v1412
        %1764 = vmatprep.mubr.bf16.mxu0 %v301
        %1765 = vmatmul.mubr.bf16.gmra.mrb[0].mxu0 %v300
        %v1766 = vpop.f32.mrb[0].mxu0
        %v1767 = vadd.f32 0.0, %v1766
        %v1768 = vpop.f32.mrb[0].mxu0
        %v1769 = vadd.f32 0.0, %v1768
        %v1770 = vpop.f32.mrb[0].mxu0
        %v1771 = vadd.f32 0.0, %v1770
        %v1772 = vpop.f32.mrb[0].mxu0
        %v1773 = vadd.f32 0.0, %v1772
        %1774 = vdwg.mxu0
        %1775 = vmatprep.subr.bf16.mxu0 %v1205
        %1776 = vmatpush1.bf16.msra.mxu0 %v1204
        %1777 = vmatprep.subr.bf16.mxu0 %v1219
        %1778 = vmatpush1.bf16.msra.mxu0 %v1218
        %1779 = vmatprep.subr.bf16.mxu0 %v1233
        %1780 = vmatpush1.bf16.msra.mxu0 %v1232
        %1781 = vmatprep.subr.bf16.mxu0 %v1247
        %1782 = vmatpush1.bf16.msra.mxu0 %v1246
        %1783 = vmatprep.subr.bf16.mxu0 %v1261
        %1784 = vmatpush1.bf16.msra.mxu0 %v1260
        %1785 = vmatprep.subr.bf16.mxu0 %v1275
        %1786 = vmatpush1.bf16.msra.mxu0 %v1274
        %1787 = vmatprep.subr.bf16.mxu0 %v1289
        %1788 = vmatpush1.bf16.msra.mxu0 %v1288
        %1789 = vmatprep.subr.bf16.mxu0 %v1303
        %1790 = vmatpush1.bf16.msra.mxu0 %v1302
        %1791 = vmatprep.subr.bf16.mxu0 %v1317
        %1792 = vmatpush1.bf16.msra.mxu0 %v1316
        %1793 = vmatprep.subr.bf16.mxu0 %v1331
        %1794 = vmatpush1.bf16.msra.mxu0 %v1330
        %1795 = vmatprep.subr.bf16.mxu0 %v1345
        %1796 = vmatpush1.bf16.msra.mxu0 %v1344
        %1797 = vmatprep.subr.bf16.mxu0 %v1359
        %1798 = vmatpush1.bf16.msra.mxu0 %v1358
        %1799 = vmatprep.subr.bf16.mxu0 %v1373
        %1800 = vmatpush1.bf16.msra.mxu0 %v1372
        %1801 = vmatprep.subr.bf16.mxu0 %v1387
        %1802 = vmatpush1.bf16.msra.mxu0 %v1386
        %1803 = vmatprep.subr.bf16.mxu0 %v1401
        %1804 = vmatpush1.bf16.msra.mxu0 %v1400
        %1805 = vmatprep.subr.bf16.mxu0 %v1415
        %1806 = vmatpush1.bf16.msra.mxu0 %v1414
        %1807 = vmatprep.mubr.bf16.mxu0 %v301
        %1808 = vmatmul.mubr.bf16.gmra.mrb[0].mxu0 %v300
        %v1809 = vpop.f32.mrb[0].mxu0
        %v1810 = vadd.f32 0.0, %v1809
        %v1811 = vpop.f32.mrb[0].mxu0
        %v1812 = vadd.f32 0.0, %v1811
        %v1813 = vpop.f32.mrb[0].mxu0
        %v1814 = vadd.f32 0.0, %v1813
        %v1815 = vpop.f32.mrb[0].mxu0
        %v1816 = vadd.f32 0.0, %v1815
        %1817 = vdwg.mxu0
        %1818 = vmatprep.subr.bf16.mxu0 %v1207
        %1819 = vmatpush1.bf16.msra.mxu0 %v1206
        %1820 = vmatprep.subr.bf16.mxu0 %v1221
        %1821 = vmatpush1.bf16.msra.mxu0 %v1220
        %1822 = vmatprep.subr.bf16.mxu0 %v1235
        %1823 = vmatpush1.bf16.msra.mxu0 %v1234
        %1824 = vmatprep.subr.bf16.mxu0 %v1249
        %1825 = vmatpush1.bf16.msra.mxu0 %v1248
        %1826 = vmatprep.subr.bf16.mxu0 %v1263
        %1827 = vmatpush1.bf16.msra.mxu0 %v1262
        %1828 = vmatprep.subr.bf16.mxu0 %v1277
        %1829 = vmatpush1.bf16.msra.mxu0 %v1276
        %1830 = vmatprep.subr.bf16.mxu0 %v1291
        %1831 = vmatpush1.bf16.msra.mxu0 %v1290
        %1832 = vmatprep.subr.bf16.mxu0 %v1305
        %1833 = vmatpush1.bf16.msra.mxu0 %v1304
        %1834 = vmatprep.subr.bf16.mxu0 %v1319
        %1835 = vmatpush1.bf16.msra.mxu0 %v1318
        %1836 = vmatprep.subr.bf16.mxu0 %v1333
        %1837 = vmatpush1.bf16.msra.mxu0 %v1332
        %1838 = vmatprep.subr.bf16.mxu0 %v1347
        %1839 = vmatpush1.bf16.msra.mxu0 %v1346
        %1840 = vmatprep.subr.bf16.mxu0 %v1361
        %1841 = vmatpush1.bf16.msra.mxu0 %v1360
        %1842 = vmatprep.subr.bf16.mxu0 %v1375
        %1843 = vmatpush1.bf16.msra.mxu0 %v1374
        %1844 = vmatprep.subr.bf16.mxu0 %v1389
        %1845 = vmatpush1.bf16.msra.mxu0 %v1388
        %1846 = vmatprep.subr.bf16.mxu0 %v1403
        %1847 = vmatpush1.bf16.msra.mxu0 %v1402
        %1848 = vmatprep.subr.bf16.mxu0 %v1417
        %1849 = vmatpush1.bf16.msra.mxu0 %v1416
        %1850 = vmatprep.mubr.bf16.mxu0 %v301
        %1851 = vmatmul.mubr.bf16.gmra.mrb[0].mxu0 %v300
        %v1852 = vpop.f32.mrb[0].mxu0
        %v1853 = vadd.f32 0.0, %v1852
        %v1854 = vpop.f32.mrb[0].mxu0
        %v1855 = vadd.f32 0.0, %v1854
        %v1856 = vpop.f32.mrb[0].mxu0
        %v1857 = vadd.f32 0.0, %v1856
        %v1858 = vpop.f32.mrb[0].mxu0
        %v1859 = vadd.f32 0.0, %v1858
        %1860 = vdwg.mxu0
        %1861 = vmatprep.subr.bf16.mxu0 %v1209
        %1862 = vmatpush1.bf16.msra.mxu0 %v1208
        %1863 = vmatprep.subr.bf16.mxu0 %v1223
        %1864 = vmatpush1.bf16.msra.mxu0 %v1222
        %1865 = vmatprep.subr.bf16.mxu0 %v1237
        %1866 = vmatpush1.bf16.msra.mxu0 %v1236
        %1867 = vmatprep.subr.bf16.mxu0 %v1251
        %1868 = vmatpush1.bf16.msra.mxu0 %v1250
        %1869 = vmatprep.subr.bf16.mxu0 %v1265
        %1870 = vmatpush1.bf16.msra.mxu0 %v1264
        %1871 = vmatprep.subr.bf16.mxu0 %v1279
        %1872 = vmatpush1.bf16.msra.mxu0 %v1278
        %1873 = vmatprep.subr.bf16.mxu0 %v1293
        %1874 = vmatpush1.bf16.msra.mxu0 %v1292
        %1875 = vmatprep.subr.bf16.mxu0 %v1307
        %1876 = vmatpush1.bf16.msra.mxu0 %v1306
        %1877 = vmatprep.subr.bf16.mxu0 %v1321
        %1878 = vmatpush1.bf16.msra.mxu0 %v1320
        %1879 = vmatprep.subr.bf16.mxu0 %v1335
        %1880 = vmatpush1.bf16.msra.mxu0 %v1334
        %1881 = vmatprep.subr.bf16.mxu0 %v1349
        %1882 = vmatpush1.bf16.msra.mxu0 %v1348
        %1883 = vmatprep.subr.bf16.mxu0 %v1363
        %1884 = vmatpush1.bf16.msra.mxu0 %v1362
        %1885 = vmatprep.subr.bf16.mxu0 %v1377
        %1886 = vmatpush1.bf16.msra.mxu0 %v1376
        %1887 = vmatprep.subr.bf16.mxu0 %v1391
        %1888 = vmatpush1.bf16.msra.mxu0 %v1390
        %1889 = vmatprep.subr.bf16.mxu0 %v1405
        %1890 = vmatpush1.bf16.msra.mxu0 %v1404
        %1891 = vmatprep.subr.bf16.mxu0 %v1419
        %1892 = vmatpush1.bf16.msra.mxu0 %v1418
        %1893 = vmatprep.mubr.bf16.mxu0 %v301
        %1894 = vmatmul.mubr.bf16.gmra.mrb[0].mxu0 %v300
        %v1895 = vpop.f32.mrb[0].mxu0
        %v1896 = vadd.f32 0.0, %v1895
        %v1897 = vpop.f32.mrb[0].mxu0
        %v1898 = vadd.f32 0.0, %v1897
        %v1899 = vpop.f32.mrb[0].mxu0
        %v1900 = vadd.f32 0.0, %v1899
        %v1901 = vpop.f32.mrb[0].mxu0
        %v1902 = vadd.f32 0.0, %v1901
        %1903 = vdwg.mxu0
        %1904 = vmatprep.subr.bf16.mxu0 %v1211
        %1905 = vmatpush1.bf16.msra.mxu0 %v1210
        %1906 = vmatprep.subr.bf16.mxu0 %v1225
        %1907 = vmatpush1.bf16.msra.mxu0 %v1224
        %1908 = vmatprep.subr.bf16.mxu0 %v1239
        %1909 = vmatpush1.bf16.msra.mxu0 %v1238
        %1910 = vmatprep.subr.bf16.mxu0 %v1253
        %1911 = vmatpush1.bf16.msra.mxu0 %v1252
        %1912 = vmatprep.subr.bf16.mxu0 %v1267
        %1913 = vmatpush1.bf16.msra.mxu0 %v1266
        %1914 = vmatprep.subr.bf16.mxu0 %v1281
        %1915 = vmatpush1.bf16.msra.mxu0 %v1280
        %1916 = vmatprep.subr.bf16.mxu0 %v1295
        %1917 = vmatpush1.bf16.msra.mxu0 %v1294
        %1918 = vmatprep.subr.bf16.mxu0 %v1309
        %1919 = vmatpush1.bf16.msra.mxu0 %v1308
        %1920 = vmatprep.subr.bf16.mxu0 %v1323
        %1921 = vmatpush1.bf16.msra.mxu0 %v1322
        %1922 = vmatprep.subr.bf16.mxu0 %v1337
        %1923 = vmatpush1.bf16.msra.mxu0 %v1336
        %1924 = vmatprep.subr.bf16.mxu0 %v1351
        %1925 = vmatpush1.bf16.msra.mxu0 %v1350
        %1926 = vmatprep.subr.bf16.mxu0 %v1365
        %1927 = vmatpush1.bf16.msra.mxu0 %v1364
        %1928 = vmatprep.subr.bf16.mxu0 %v1379
        %1929 = vmatpush1.bf16.msra.mxu0 %v1378
        %1930 = vmatprep.subr.bf16.mxu0 %v1393
        %1931 = vmatpush1.bf16.msra.mxu0 %v1392
        %1932 = vmatprep.subr.bf16.mxu0 %v1407
        %1933 = vmatpush1.bf16.msra.mxu0 %v1406
        %1934 = vmatprep.subr.bf16.mxu0 %v1421
        %1935 = vmatpush1.bf16.msra.mxu0 %v1420
        %1936 = vmatprep.mubr.bf16.mxu0 %v301
        %1937 = vmatmul.mubr.bf16.gmra.mrb[0].mxu0 %v300
        %v1938 = vpop.f32.mrb[0].mxu0
        %v1939 = vadd.f32 0.0, %v1938
        %v1940 = vpop.f32.mrb[0].mxu0
        %v1941 = vadd.f32 0.0, %v1940
        %v1942 = vpop.f32.mrb[0].mxu0
        %v1943 = vadd.f32 0.0, %v1942
        %v1944 = vpop.f32.mrb[0].mxu0
        %v1945 = vadd.f32 0.0, %v1944
        %1946 = vdwg.mxu0
        %v1947 = vlaneseq
        %v1948 = vshrl.u32 %v1947, 7
        %v1949 = vadd.s32 %v1948, 8
        %v1950 = vrot.slane %v1681, 5
        %v1951 = vrot.slane %v1683, 5
        %v1952 = vrot.slane %v1685, 5
        %v1953 = vrot.slane %v1687, 5
        %vm1954 = vcmp.lt.s32.totalorder %v1948, 3
        %v1955 = vsel %vm1954, %v1950, %v1952
        %v1956 = vsel %vm1954, %v1951, %v1953
        %v1957 = vsel %vm1954, %v1952, %v1950
        %v1958 = vsel %vm1954, %v1953, %v1951
        %vm1959 = vcmp.ge.s32.totalorder %v1948, 3
        %vm1960 = vcmp.ge.s32.totalorder %v1949, 3
        %vm1961 = vcmp.lt.s32.totalorder %v1948, 16
        %vm1962 = vcmp.lt.s32.totalorder %v1949, 16
        %vm1963 = vmand %vm1959, %vm1961
        %vm1964 = vmand %vm1960, %vm1962
        %v1965 = vsel %vm1963, %v1957, 0.0
        %v1966 = vsel %vm1963, %v1958, 0.0
        %v1967 = vsel %vm1964, %v1955, 0.0
        %v1968 = vsel %vm1964, %v1956, 0.0
        %v1969 = vadd.f32 %v1965, 0.0
        %v1970 = vadd.f32 %v1966, 0.0
        %v1971 = vadd.f32 %v1967, 0.0
        %v1972 = vadd.f32 %v1968, 0.0
        %v1973 = vrot.slane %v1724, 6
        %v1974 = vrot.slane %v1726, 6
        %v1975 = vrot.slane %v1728, 6
        %v1976 = vrot.slane %v1730, 6
        %vm1977 = vcmp.lt.s32.totalorder %v1948, 2
        %v1978 = vsel %vm1977, %v1973, %v1975
        %v1979 = vsel %vm1977, %v1974, %v1976
        %v1980 = vsel %vm1977, %v1975, %v1973
        %v1981 = vsel %vm1977, %v1976, %v1974
        %vm1982 = vcmp.ge.s32.totalorder %v1948, 2
        %vm1983 = vcmp.ge.s32.totalorder %v1949, 2
        %vm1984 = vmand %vm1982, %vm1961
        %vm1985 = vmand %vm1983, %vm1962
        %v1986 = vsel %vm1984, %v1980, 0.0
        %v1987 = vsel %vm1984, %v1981, 0.0
        %v1988 = vsel %vm1985, %v1978, 0.0
        %v1989 = vsel %vm1985, %v1979, 0.0
        %v1990 = vadd.f32 %v1969, %v1986
        %v1991 = vadd.f32 %v1970, %v1987
        %v1992 = vadd.f32 %v1971, %v1988
        %v1993 = vadd.f32 %v1972, %v1989
        %v1994 = vrot.slane %v1767, 7
        %v1995 = vrot.slane %v1769, 7
        %v1996 = vrot.slane %v1771, 7
        %v1997 = vrot.slane %v1773, 7
        %vm1998 = vcmp.lt.s32.totalorder %v1948, 1
        %v1999 = vsel %vm1998, %v1994, %v1996
        %v2000 = vsel %vm1998, %v1995, %v1997
        %v2001 = vsel %vm1998, %v1996, %v1994
        %v2002 = vsel %vm1998, %v1997, %v1995
        %vm2003 = vcmp.ge.s32.totalorder %v1948, 1
        %vm2004 = vcmp.ge.s32.totalorder %v1949, 1
        %vm2005 = vmand %vm2003, %vm1961
        %vm2006 = vmand %vm2004, %vm1962
        %v2007 = vsel %vm2005, %v2001, 0.0
        %v2008 = vsel %vm2005, %v2002, 0.0
        %v2009 = vsel %vm2006, %v1999, 0.0
        %v2010 = vsel %vm2006, %v2000, 0.0
        %v2011 = vadd.f32 %v1990, %v2007
        %v2012 = vadd.f32 %v1991, %v2008
        %v2013 = vadd.f32 %v1992, %v2009
        %v2014 = vadd.f32 %v1993, %v2010
        %v2015 = vadd.f32 %v2011, %v1810
        %v2016 = vadd.f32 %v2012, %v1812
        %v2017 = vadd.f32 %v2013, %v1814
        %v2018 = vadd.f32 %v2014, %v1816
        %v2019 = vrot.slane %v1853, 1
        %v2020 = vrot.slane %v1855, 1
        %v2021 = vrot.slane %v1857, 1
        %v2022 = vrot.slane %v1859, 1
        %vm2023 = vcmp.lt.s32.totalorder %v1948, 7
        %v2024 = vsel %vm2023, %v2019, %v2021
        %v2025 = vsel %vm2023, %v2020, %v2022
        %v2026 = vsel %vm2023, %v2021, %v2019
        %v2027 = vsel %vm2023, %v2022, %v2020
        %vm2028 = vcmp.ge.s32.totalorder %v1948, 0
        %vm2029 = vcmp.ge.s32.totalorder %v1949, 0
        %vm2030 = vcmp.lt.s32.totalorder %v1948, 15
        %vm2031 = vcmp.lt.s32.totalorder %v1949, 15
        %vm2032 = vmand %vm2028, %vm2030
        %vm2033 = vmand %vm2029, %vm2031
        %v2034 = vsel %vm2032, %v2024, 0.0
        %v2035 = vsel %vm2032, %v2025, 0.0
        %v2036 = vsel %vm2033, %v2026, 0.0
        %v2037 = vsel %vm2033, %v2027, 0.0
        %v2038 = vadd.f32 %v2015, %v2034
        %v2039 = vadd.f32 %v2016, %v2035
        %v2040 = vadd.f32 %v2017, %v2036
        %v2041 = vadd.f32 %v2018, %v2037
        %v2042 = vrot.slane %v1896, 2
        %v2043 = vrot.slane %v1898, 2
        %v2044 = vrot.slane %v1900, 2
        %v2045 = vrot.slane %v1902, 2
        %vm2046 = vcmp.lt.s32.totalorder %v1948, 6
        %v2047 = vsel %vm2046, %v2042, %v2044
        %v2048 = vsel %vm2046, %v2043, %v2045
        %v2049 = vsel %vm2046, %v2044, %v2042
        %v2050 = vsel %vm2046, %v2045, %v2043
        %vm2051 = vcmp.lt.s32.totalorder %v1948, 14
        %vm2052 = vcmp.lt.s32.totalorder %v1949, 14
        %vm2053 = vmand %vm2028, %vm2051
        %vm2054 = vmand %vm2029, %vm2052
        %v2055 = vsel %vm2053, %v2047, 0.0
        %v2056 = vsel %vm2053, %v2048, 0.0
        %v2057 = vsel %vm2054, %v2049, 0.0
        %v2058 = vsel %vm2054, %v2050, 0.0
        %v2059 = vadd.f32 %v2038, %v2055
        %v2060 = vadd.f32 %v2039, %v2056
        %v2061 = vadd.f32 %v2040, %v2057
        %v2062 = vadd.f32 %v2041, %v2058
        %v2063 = vrot.slane %v1939, 3
        %v2064 = vrot.slane %v1941, 3
        %v2065 = vrot.slane %v1943, 3
        %v2066 = vrot.slane %v1945, 3
        %vm2067 = vcmp.lt.s32.totalorder %v1948, 5
        %v2068 = vsel %vm2067, %v2063, %v2065
        %v2069 = vsel %vm2067, %v2064, %v2066
        %v2070 = vsel %vm2067, %v2065, %v2063
        %v2071 = vsel %vm2067, %v2066, %v2064
        %vm2072 = vcmp.lt.s32.totalorder %v1948, 13
        %vm2073 = vcmp.lt.s32.totalorder %v1949, 13
        %vm2074 = vmand %vm2028, %vm2072
        %vm2075 = vmand %vm2029, %vm2073
        %v2076 = vsel %vm2074, %v2068, 0.0
        %v2077 = vsel %vm2074, %v2069, 0.0
        %v2078 = vsel %vm2075, %v2070, 0.0
        %v2079 = vsel %vm2075, %v2071, 0.0
        %v2080 = vadd.f32 %v2059, %v2076
        %v2081 = vadd.f32 %v2060, %v2077
        %v2082 = vadd.f32 %v2061, %v2078
        %v2083 = vadd.f32 %v2062, %v2079
        // Predicated region
        $region61: #{_model_forward.1} parent=43 // pred_check
          %p2084 = pneg %p284
        $region62: #{_model_forward.1} parent=43 // pred_check_branch
          %2086 = sbr.rel (%p2084) target = $region64
        $region63: #{_model_forward.1} parent=43 // pred_region
          %v2087 = vld [vmem:[#allocation5] ss:$4 sm:$0x3]
          %v2089 = vlaneseq
          %v2090 = vshrl.u32 %v2089, 7
          %v2091 = vsub.s32 0, %v2090
          %v2092 = vrot.slane %v2087, %v2091
          %v2093 = vlaneseq
          %v2094 = vshrl.u32 %v2093, 7
          %v2095 = vsub.s32 1, %v2094
          %v2096 = vrot.slane %v2087, %v2095
          %v2099 = vadd.f32 %v2080, %v2092
          %v2100 = vadd.f32 %v2081, %v2096
          %v2101 = vadd.f32 %v2082, %v2092
          %v2102 = vadd.f32 %v2083, %v2096
          %v2103 = vld [vmem:[%s0] sm:$0xff]
          %v2104 = vld [vmem:[%s0 + $0x8] sm:$0xff]
          %v2105 = vld [vmem:[%s0 + $0x10] sm:$0xff]
          %v2106 = vld [vmem:[%s0 + $0x18] sm:$0xff]
          %v2107 = vadd.f32 %v2099, %v2103
          %v2108 = vadd.f32 %v2100, %v2104
          %v2109 = vadd.f32 %v2101, %v2105
          %v2110 = vadd.f32 %v2102, %v2106
          %2111 = vst [vmem:[#allocation2] sm:$0xff] %v2107
          %2112 = vst [vmem:[#allocation2 + $0x8] sm:$0xff] %v2108
          %2113 = vst [vmem:[#allocation2 + $0x10] sm:$0xff] %v2109
          %2114 = vst [vmem:[#allocation2 + $0x18] sm:$0xff] %v2110
        $region64: #{_model_forward.1} parent=43 // pred_fallthru
          _
        %p2115 = scmp.eq.s32.totalorder %s21, 1
        // Predicated region
        $region65: #{_model_forward.1} parent=43 // pred_check
          %p2116 = pneg %p2115
        $region66: #{_model_forward.1} parent=43 // pred_check_branch
          %2118 = sbr.rel (%p2116) target = $region68
        $region67: #{_model_forward.1} parent=43 // pred_region
          %s2119 = scalar_lea.vmem [#allocation5], 1
          %v2120 = vld [vmem:[%s2119] ss:$4 sm:$0x3]
          %v2122 = vlaneseq
          %v2123 = vshrl.u32 %v2122, 7
          %v2124 = vsub.s32 0, %v2123
          %v2125 = vrot.slane %v2120, %v2124
          %v2126 = vlaneseq
          %v2127 = vshrl.u32 %v2126, 7
          %v2128 = vsub.s32 1, %v2127
          %v2129 = vrot.slane %v2120, %v2128
          %v2132 = vadd.f32 %v2080, %v2125
          %v2133 = vadd.f32 %v2081, %v2129
          %v2134 = vadd.f32 %v2082, %v2125
          %v2135 = vadd.f32 %v2083, %v2129
          %v2136 = vld [vmem:[%s1] sm:$0xff]
          %v2137 = vld [vmem:[%s1 + $0x8] sm:$0xff]
          %v2138 = vld [vmem:[%s1 + $0x10] sm:$0xff]
          %v2139 = vld [vmem:[%s1 + $0x18] sm:$0xff]
          %v2140 = vadd.f32 %v2132, %v2136
          %v2141 = vadd.f32 %v2133, %v2137
          %v2142 = vadd.f32 %v2134, %v2138
          %v2143 = vadd.f32 %v2135, %v2139
          %2144 = vst [vmem:[#allocation2] sm:$0xff] %v2140
          %2145 = vst [vmem:[#allocation2 + $0x8] sm:$0xff] %v2141
          %2146 = vst [vmem:[#allocation2 + $0x10] sm:$0xff] %v2142
          %2147 = vst [vmem:[#allocation2 + $0x18] sm:$0xff] %v2143
        $region68: #{_model_forward.1} parent=43 // pred_fallthru
          _
        %p2148 = scmp.eq.s32.totalorder %s21, 2
        // Predicated region
        $region69: #{_model_forward.1} parent=43 // pred_check
          %p2149 = pneg %p2148
        $region70: #{_model_forward.1} parent=43 // pred_check_branch
          %2151 = sbr.rel (%p2149) target = $region72
        $region71: #{_model_forward.1} parent=43 // pred_region
          %s2152 = scalar_lea.vmem [#allocation5], 2
          %v2153 = vld [vmem:[%s2152] ss:$4 sm:$0x3]
          %v2155 = vlaneseq
          %v2156 = vshrl.u32 %v2155, 7
          %v2157 = vsub.s32 0, %v2156
          %v2158 = vrot.slane %v2153, %v2157
          %v2159 = vlaneseq
          %v2160 = vshrl.u32 %v2159, 7
          %v2161 = vsub.s32 1, %v2160
          %v2162 = vrot.slane %v2153, %v2161
          %v2165 = vadd.f32 %v2080, %v2158
          %v2166 = vadd.f32 %v2081, %v2162
          %v2167 = vadd.f32 %v2082, %v2158
          %v2168 = vadd.f32 %v2083, %v2162
          %v2169 = vmax.f32 %v2165, 0.0
          %v2170 = vmax.f32 %v2166, 0.0
          %v2171 = vmax.f32 %v2167, 0.0
          %v2172 = vmax.f32 %v2168, 0.0
          %v2173 = vpack.c.bf16 %v2171, %v2169
          %v2174 = vpack.c.bf16 %v2172, %v2170
          %v2175 = vld [vmem:[#allocation7] sm:$0xff]
          %v2176 = vld [vmem:[#allocation7 + $0x8] sm:$0xff]
          %v2177 = vld [vmem:[#allocation7 + $0x10] sm:$0xff]
          %v2178 = vld [vmem:[#allocation7 + $0x18] sm:$0xff]
          %v2179 = vld [vmem:[#allocation7 + $0x20] sm:$0xff]
          %v2180 = vld [vmem:[#allocation7 + $0x28] sm:$0xff]
          %v2181 = vld [vmem:[#allocation7 + $0x30] sm:$0xff]
          %v2182 = vld [vmem:[#allocation7 + $0x38] sm:$0xff]
          %v2183 = vld [vmem:[#allocation7 + $0x40] sm:$0xff]
          %v2184 = vld [vmem:[#allocation7 + $0x48] sm:$0xff]
          %v2185 = vld [vmem:[#allocation7 + $0x50] sm:$0xff]
          %v2186 = vld [vmem:[#allocation7 + $0x58] sm:$0xff]
          %v2187 = vld [vmem:[#allocation7 + $0x60] sm:$0xff]
          %v2188 = vld [vmem:[#allocation7 + $0x68] sm:$0xff]
          %v2189 = vld [vmem:[#allocation7 + $0x70] sm:$0xff]
          %v2190 = vld [vmem:[#allocation7 + $0x78] sm:$0xff]
          %v2191 = vld [vmem:[#allocation7 + $0x80] sm:$0xff]
          %v2192 = vld [vmem:[#allocation7 + $0x88] sm:$0xff]
          %v2193 = vld [vmem:[#allocation7 + $0x90] sm:$0xff]
          %v2194 = vld [vmem:[#allocation7 + $0x98] sm:$0xff]
          %v2195 = vld [vmem:[#allocation7 + $0xa0] sm:$0xff]
          %v2196 = vld [vmem:[#allocation7 + $0xa8] sm:$0xff]
          %v2197 = vld [vmem:[#allocation7 + $0xb0] sm:$0xff]
          %v2198 = vld [vmem:[#allocation7 + $0xb8] sm:$0xff]
          %v2199 = vld [vmem:[#allocation7 + $0xc0] sm:$0xff]
          %v2200 = vld [vmem:[#allocation7 + $0xc8] sm:$0xff]
          %v2201 = vld [vmem:[#allocation7 + $0xd0] sm:$0xff]
          %v2202 = vld [vmem:[#allocation7 + $0xd8] sm:$0xff]
          %v2203 = vld [vmem:[#allocation7 + $0xe0] sm:$0xff]
          %v2204 = vld [vmem:[#allocation7 + $0xe8] sm:$0xff]
          %v2205 = vld [vmem:[#allocation7 + $0xf0] sm:$0xff]
          %v2206 = vld [vmem:[#allocation7 + $0xf8] sm:$0xff]
          %s2207 = scalar_lea.vmem [#allocation5], 3
          %v2208 = vld [vmem:[%s2207] ss:$4 sm:$0x3]
          %v2210 = vlaneseq
          %v2211 = vshrl.u32 %v2210, 7
          %v2212 = vsub.s32 0, %v2211
          %v2213 = vrot.slane %v2208, %v2212
          %v2214 = vlaneseq
          %v2215 = vshrl.u32 %v2214, 7
          %v2216 = vsub.s32 1, %v2215
          %v2217 = vrot.slane %v2208, %v2216
          %v2252 = vunpack.c.l.b16 %v2175
          %v2253 = vunpack.c.h.b16 %v2175
          %v2254 = vunpack.c.l.b16 %v2176
          %v2255 = vunpack.c.h.b16 %v2176
          %v2256 = vunpack.c.l.b16 %v2177
          %v2257 = vunpack.c.h.b16 %v2177
          %v2258 = vunpack.c.l.b16 %v2178
          %v2259 = vunpack.c.h.b16 %v2178
          %v2260 = vunpack.c.l.b16 %v2179
          %v2261 = vunpack.c.h.b16 %v2179
          %v2262 = vunpack.c.l.b16 %v2180
          %v2263 = vunpack.c.h.b16 %v2180
          %v2264 = vunpack.c.l.b16 %v2181
          %v2265 = vunpack.c.h.b16 %v2181
          %v2266 = vunpack.c.l.b16 %v2182
          %v2267 = vunpack.c.h.b16 %v2182
          %v2268 = vunpack.c.l.b16 %v2183
          %v2269 = vunpack.c.h.b16 %v2183
          %v2270 = vunpack.c.l.b16 %v2184
          %v2271 = vunpack.c.h.b16 %v2184
          %v2272 = vunpack.c.l.b16 %v2185
          %v2273 = vunpack.c.h.b16 %v2185
          %v2274 = vunpack.c.l.b16 %v2186
          %v2275 = vunpack.c.h.b16 %v2186
          %v2276 = vunpack.c.l.b16 %v2187
          %v2277 = vunpack.c.h.b16 %v2187
          %v2278 = vunpack.c.l.b16 %v2188
          %v2279 = vunpack.c.h.b16 %v2188
          %v2280 = vunpack.c.l.b16 %v2189
          %v2281 = vunpack.c.h.b16 %v2189
          %v2282 = vunpack.c.l.b16 %v2190
          %v2283 = vunpack.c.h.b16 %v2190
          %v2284 = vunpack.c.l.b16 %v2191
          %v2285 = vunpack.c.h.b16 %v2191
          %v2286 = vunpack.c.l.b16 %v2192
          %v2287 = vunpack.c.h.b16 %v2192
          %v2288 = vunpack.c.l.b16 %v2193
          %v2289 = vunpack.c.h.b16 %v2193
          %v2290 = vunpack.c.l.b16 %v2194
          %v2291 = vunpack.c.h.b16 %v2194
          %v2292 = vunpack.c.l.b16 %v2195
          %v2293 = vunpack.c.h.b16 %v2195
          %v2294 = vunpack.c.l.b16 %v2196
          %v2295 = vunpack.c.h.b16 %v2196
          %v2296 = vunpack.c.l.b16 %v2197
          %v2297 = vunpack.c.h.b16 %v2197
          %v2298 = vunpack.c.l.b16 %v2198
          %v2299 = vunpack.c.h.b16 %v2198
          %v2300 = vunpack.c.l.b16 %v2199
          %v2301 = vunpack.c.h.b16 %v2199
          %v2302 = vunpack.c.l.b16 %v2200
          %v2303 = vunpack.c.h.b16 %v2200
          %v2304 = vunpack.c.l.b16 %v2201
          %v2305 = vunpack.c.h.b16 %v2201
          %v2306 = vunpack.c.l.b16 %v2202
          %v2307 = vunpack.c.h.b16 %v2202
          %v2308 = vunpack.c.l.b16 %v2203
          %v2309 = vunpack.c.h.b16 %v2203
          %v2310 = vunpack.c.l.b16 %v2204
          %v2311 = vunpack.c.h.b16 %v2204
          %v2312 = vunpack.c.l.b16 %v2205
          %v2313 = vunpack.c.h.b16 %v2205
          %v2314 = vunpack.c.l.b16 %v2206
          %v2315 = vunpack.c.h.b16 %v2206
          %v2316 = vpack.c.b16 %v2254, %v2252
          %v2317 = vpack.c.b16 %v2255, %v2253
          %v2318 = vpack.c.b16 %v2258, %v2256
          %v2319 = vpack.c.b16 %v2259, %v2257
          %v2320 = vpack.c.b16 %v2262, %v2260
          %v2321 = vpack.c.b16 %v2263, %v2261
          %v2322 = vpack.c.b16 %v2266, %v2264
          %v2323 = vpack.c.b16 %v2267, %v2265
          %v2324 = vpack.c.b16 %v2270, %v2268
          %v2325 = vpack.c.b16 %v2271, %v2269
          %v2326 = vpack.c.b16 %v2274, %v2272
          %v2327 = vpack.c.b16 %v2275, %v2273
          %v2328 = vpack.c.b16 %v2278, %v2276
          %v2329 = vpack.c.b16 %v2279, %v2277
          %v2330 = vpack.c.b16 %v2282, %v2280
          %v2331 = vpack.c.b16 %v2283, %v2281
          %v2332 = vpack.c.b16 %v2286, %v2284
          %v2333 = vpack.c.b16 %v2287, %v2285
          %v2334 = vpack.c.b16 %v2290, %v2288
          %v2335 = vpack.c.b16 %v2291, %v2289
          %v2336 = vpack.c.b16 %v2294, %v2292
          %v2337 = vpack.c.b16 %v2295, %v2293
          %v2338 = vpack.c.b16 %v2298, %v2296
          %v2339 = vpack.c.b16 %v2299, %v2297
          %v2340 = vpack.c.b16 %v2302, %v2300
          %v2341 = vpack.c.b16 %v2303, %v2301
          %v2342 = vpack.c.b16 %v2306, %v2304
          %v2343 = vpack.c.b16 %v2307, %v2305
          %v2344 = vpack.c.b16 %v2310, %v2308
          %v2345 = vpack.c.b16 %v2311, %v2309
          %v2346 = vpack.c.b16 %v2314, %v2312
          %v2347 = vpack.c.b16 %v2315, %v2313
          %2380 = vmatprep.subr.bf16.mxu0 %v2317
          %2381 = vmatpush1.bf16.msra.mxu0 %v2316
          %2382 = vmatprep.subr.bf16.mxu0 %v2319
          %2383 = vmatpush1.bf16.msra.mxu0 %v2318
          %2384 = vmatprep.subr.bf16.mxu0 %v2321
          %2385 = vmatpush1.bf16.msra.mxu0 %v2320
          %2386 = vmatprep.subr.bf16.mxu0 %v2323
          %2387 = vmatpush1.bf16.msra.mxu0 %v2322
          %2388 = vmatprep.subr.bf16.mxu0 %v2325
          %2389 = vmatpush1.bf16.msra.mxu0 %v2324
          %2390 = vmatprep.subr.bf16.mxu0 %v2327
          %2391 = vmatpush1.bf16.msra.mxu0 %v2326
          %2392 = vmatprep.subr.bf16.mxu0 %v2329
          %2393 = vmatpush1.bf16.msra.mxu0 %v2328
          %2394 = vmatprep.subr.bf16.mxu0 %v2331
          %2395 = vmatpush1.bf16.msra.mxu0 %v2330
          %2396 = vmatprep.subr.bf16.mxu0 %v2333
          %2397 = vmatpush1.bf16.msra.mxu0 %v2332
          %2398 = vmatprep.subr.bf16.mxu0 %v2335
          %2399 = vmatpush1.bf16.msra.mxu0 %v2334
          %2400 = vmatprep.subr.bf16.mxu0 %v2337
          %2401 = vmatpush1.bf16.msra.mxu0 %v2336
          %2402 = vmatprep.subr.bf16.mxu0 %v2339
          %2403 = vmatpush1.bf16.msra.mxu0 %v2338
          %2404 = vmatprep.subr.bf16.mxu0 %v2341
          %2405 = vmatpush1.bf16.msra.mxu0 %v2340
          %2406 = vmatprep.subr.bf16.mxu0 %v2343
          %2407 = vmatpush1.bf16.msra.mxu0 %v2342
          %2408 = vmatprep.subr.bf16.mxu0 %v2345
          %2409 = vmatpush1.bf16.msra.mxu0 %v2344
          %2410 = vmatprep.subr.bf16.mxu0 %v2347
          %2411 = vmatpush1.bf16.msra.mxu0 %v2346
          %2412 = vmatprep.mubr.bf16.mxu0 %v2174
          %2413 = vmatmul.mubr.bf16.gmra.mrb[0].mxu0 %v2173
          %v2414 = vpop.f32.mrb[0].mxu0
          %v2415 = vadd.f32 %v2213, %v2414
          %v2416 = vpop.f32.mrb[0].mxu0
          %v2417 = vadd.f32 %v2217, %v2416
          %v2418 = vpop.f32.mrb[0].mxu0
          %v2419 = vadd.f32 %v2213, %v2418
          %v2420 = vpop.f32.mrb[0].mxu0
          %v2421 = vadd.f32 %v2217, %v2420
          %2422 = vdwg.mxu0
          %v2423 = vld [vmem:[%s0] sm:$0xff]
          %v2424 = vld [vmem:[%s0 + $0x8] sm:$0xff]
          %v2425 = vld [vmem:[%s0 + $0x10] sm:$0xff]
          %v2426 = vld [vmem:[%s0 + $0x18] sm:$0xff]
          %v2427 = vadd.f32 %v2423, %v2415
          %v2428 = vadd.f32 %v2424, %v2417
          %v2429 = vadd.f32 %v2425, %v2419
          %v2430 = vadd.f32 %v2426, %v2421
          %v2431 = vld [vmem:[%s2] sm:$0xff]
          %v2432 = vld [vmem:[%s2 + $0x8] sm:$0xff]
          %v2433 = vld [vmem:[%s2 + $0x10] sm:$0xff]
          %v2434 = vld [vmem:[%s2 + $0x18] sm:$0xff]
          %v2435 = vadd.f32 %v2427, %v2431
          %v2436 = vadd.f32 %v2428, %v2432
          %v2437 = vadd.f32 %v2429, %v2433
          %v2438 = vadd.f32 %v2430, %v2434
          %v2439 = vmax.f32 %v2435, 0.0
          %v2440 = vmax.f32 %v2436, 0.0
          %v2441 = vmax.f32 %v2437, 0.0
          %v2442 = vmax.f32 %v2438, 0.0
          %2443 = vst [vmem:[%s6] sm:$0xff] %v2439
          %2444 = vst [vmem:[%s6 + $0x8] sm:$0xff] %v2440
          %2445 = vst [vmem:[%s6 + $0x10] sm:$0xff] %v2441
          %2446 = vst [vmem:[%s6 + $0x18] sm:$0xff] %v2442
        $region72: #{_model_forward.1} parent=43 // pred_fallthru
          _
        // Predicated region
        $region73: #{_model_forward.1} parent=43 // pred_check
          %p2447 = pneg %p165
        $region74: #{_model_forward.1} parent=43 // pred_check_branch
          %2449 = sbr.rel (%p2447) target = $region76
        $region75: #{_model_forward.1} parent=43 // pred_region
          _
        $region76: #{_model_forward.1} parent=43 // pred_fallthru
          _
        // Predicated region
        $region77: #{_model_forward.1} parent=43 // pred_check
          %p2450 = pneg %p165
        $region78: #{_model_forward.1} parent=43 // pred_check_branch
          %2452 = sbr.rel (%p2450) target = $region80
        $region79: #{_model_forward.1} parent=43 // pred_region
          _
        $region80: #{_model_forward.1} parent=43 // pred_fallthru
          _
      $region44: #{_model_forward.1} parent=5 // pred_fallthru
        _
      %p2453 = scmp.le.s32.totalorder 2, %s16
      // Predicated region
      $region81: #{_model_forward.1} parent=5 // pred_check
        %p2454 = pneg %p2453
      $region82: #{_model_forward.1} parent=5 // pred_check_branch
        %2456 = sbr.rel (%p2454) target = $region84
      $region83: #{_model_forward.1} parent=5 // pred_region
        %s2457 = ssub.s32 %s16, 2
      $region84: #{_model_forward.1} parent=5 // pred_fallthru
        _
    $region6: #{_model_forward.1} parent=1 // loop_footer
      %s20 = sadd.s32 1, %s16
    $region7: #{_model_forward.1} parent=1 // loop_footer_branch
      %15 = sbr.rel target = $region3
    $region8: #{_model_forward.1} parent=1 // loop_exit
      _
    %2458 = vsyncpa [#allocation4], 1
    %s2459 = scalar_lea.sflag [#allocation4], 1
    %2460 = vsyncpa %s2459, 1
    %2461 = vsyncpa [#allocation6], 1

</llo_original>
